<compile_context>
chip_gen: v7x
topology: tpu7x:2x2x1
jax: 0.10.0
libtpu: 0.0.40
codegen_flags: <defaults>
</compile_context>

<pallas_src>
import jax
import jax.numpy as jnp
from jax import lax
from jax.experimental import pallas as pl
from jax.experimental.pallas import tpu as pltpu


_LANE = 128
_VMEM_LIMIT = 48 * 1024 * 1024     # safe on v5e/v6e (128 MiB) and v7x (64 MiB)
_VMEM_BUDGET = 40 * 1024 * 1024    # tile-footprint budget used when picking tiles


def _round_up(x, m):
    return -(-x // m) * m


def _pad2d(x, rows, cols):
    r, c = x.shape
    if (r, c) == (rows, cols):
        return x
    return jnp.pad(x, ((0, rows - r), (0, cols - c)))


def _sublane_align(dtype):
    # bf16/f16 pack two rows per sublane -> second-minor block dim must be a
    # multiple of 16; 8 suffices for 32-bit dtypes.
    return 16 if jnp.dtype(dtype).itemsize == 2 else 8


def _pick_tm(m, align):
    """Pick an M tile (multiple of `align`) and the padded M it divides.

    Prefers >= 2 tiles so the 'parallel' M axis can be sharded across both
    TensorCores on v7x (harmless no-op on v5e/v6e).
    """
    m_al = _round_up(m, align)
    if m_al >= 512:
        tm = 256
    elif m_al >= 2 * align:
        tm = _round_up(m_al // 2, align)
    else:
        tm = m_al
    return tm, _round_up(m_al, tm)


def _largest_divisor_tile(dim, cap):
    """Largest multiple of 128 dividing `dim` (itself a multiple of 128), <= cap."""
    best = _LANE
    t = _LANE
    while t <= min(cap, dim):
        if dim % t == 0:
            best = t
        t += _LANE
    return best


def _pick_tn(n_pad, k_pad, tm, x_bytes, w_bytes, out_bytes):
    """N tile for the single-linear kernel. K is kept whole (single MXU step)."""
    # TODO(synk): K-tiled accumulation for very large in_features (>~8K) is not
    # implemented; MoBY dims (<= 4096) always fit a single resident K step.
    for cap in (n_pad, 1024, 512, 256, 128):
        tn = _largest_divisor_tile(n_pad, cap)
        cost = (2 * tm * k_pad * x_bytes      # x block (double-buffered)
                + 2 * tn * k_pad * w_bytes    # weight block
                + 2 * tm * tn * out_bytes     # output block
                + 4 * 4 * tn)                 # scale / shift blocks
        if cost <= _VMEM_BUDGET:
            return tn
    return _LANE


# --------------------------------------------------------------------------
# Kernels
# --------------------------------------------------------------------------

def _fused_mlp2_kernel(x_ref, w1_ref, scale_ref, shift_ref, w2_ref, b2_ref, o_ref):
    """One (tm, N2) output tile of Linear_out(ReLU(BN(Linear_hidden(x))))."""
    a = x_ref[...].astype(w1_ref.dtype)
    h = lax.dot_general(a, w1_ref[...], (((1,), (1,)), ((), ())),
                        preferred_element_type=jnp.float32)
    h = jnp.maximum(h * scale_ref[...] + shift_ref[...], 0.0)
    y = lax.dot_general(h.astype(w2_ref.dtype), w2_ref[...],
                        (((1,), (1,)), ((), ())),
                        preferred_element_type=jnp.float32)
    o_ref[...] = (y + b2_ref[...]).astype(o_ref.dtype)


def _linear_bn_relu_kernel(x_ref, w_ref, scale_ref, shift_ref, o_ref):
    """One (tm, tn) tile of ReLU(scale * (x @ w.T) + shift)   (single K step)."""
    a = x_ref[...].astype(w_ref.dtype)
    y = lax.dot_general(a, w_ref[...], (((1,), (1,)), ((), ())),
                        preferred_element_type=jnp.float32)
    y = jnp.maximum(y * scale_ref[...] + shift_ref[...], 0.0)
    o_ref[...] = y.astype(o_ref.dtype)


def _linear_bias_kernel(x_ref, w_ref, bias_ref, o_ref):
    """One (tm, tn) tile of x @ w.T + bias   (single K step)."""
    a = x_ref[...].astype(w_ref.dtype)
    y = lax.dot_general(a, w_ref[...], (((1,), (1,)), ((), ())),
                        preferred_element_type=jnp.float32)
    o_ref[...] = (y + bias_ref[...]).astype(o_ref.dtype)


# --------------------------------------------------------------------------
# Wrappers
# --------------------------------------------------------------------------

def _fused_mlp2(x, hidden, out, out_dtype):
    m, _ = x.shape
    n1_pad, k1_pad = hidden["w"].shape
    n2_pad, k2_pad = out["w"].shape
    assert k2_pad == n1_pad, (hidden["w"].shape, out["w"].shape)

    tm, m_pad = _pick_tm(m, _sublane_align(hidden["w"].dtype))
    x_p = _pad2d(x, m_pad, k1_pad)
    grid = (m_pad // tm,)

    cost = pl.CostEstimate(
        flops=2 * m_pad * (n1_pad * k1_pad + n2_pad * n1_pad),
        transcendentals=0,
        bytes_accessed=(x_p.size * x_p.dtype.itemsize
                        + hidden["w"].size * hidden["w"].dtype.itemsize
                        + out["w"].size * out["w"].dtype.itemsize
                        + m_pad * n2_pad * jnp.dtype(out_dtype).itemsize),
    )

    y = pl.pallas_call(
        _fused_mlp2_kernel,
        out_shape=jax.ShapeDtypeStruct((m_pad, n2_pad), out_dtype),
        grid=grid,
        in_specs=[
            pl.BlockSpec((tm, k1_pad), lambda i: (i, 0)),       # x row-block
            pl.BlockSpec((n1_pad, k1_pad), lambda i: (0, 0)),   # W1, VMEM-resident
            pl.BlockSpec((1, n1_pad), lambda i: (0, 0)),        # BN scale
            pl.BlockSpec((1, n1_pad), lambda i: (0, 0)),        # BN shift (+bias)
            pl.BlockSpec((n2_pad, n1_pad), lambda i: (0, 0)),   # W2, VMEM-resident
            pl.BlockSpec((1, n2_pad), lambda i: (0, 0)),        # out bias
        ],
        out_specs=pl.BlockSpec((tm, n2_pad), lambda i: (i, 0)),
        compiler_params=pltpu.CompilerParams(
            dimension_semantics=("parallel",),
            vmem_limit_bytes=_VMEM_LIMIT),
        cost_estimate=cost,
    )(x_p, hidden["w"], hidden["scale"], hidden["shift"], out["w"], out["b"])

    if m_pad != m or n2_pad != out["n"]:
        y = y[:m, :out["n"]]
    return y


def _linear(x, w_pad, scale_pad, shift_pad, n_valid, *, relu_bn, out_dtype):
    """y = relu?(scale * (x @ w.T) + shift) with pre-padded [N_pad, K_pad] weight."""
    m, k = x.shape
    n_pad, k_pad = w_pad.shape
    assert k <= k_pad

    tm, m_pad = _pick_tm(m, _sublane_align(w_pad.dtype))
    x_p = _pad2d(x, m_pad, k_pad)
    tn = _pick_tn(n_pad, k_pad, tm, x.dtype.itemsize, w_pad.dtype.itemsize,
                  jnp.dtype(out_dtype).itemsize)
    grid = (m_pad // tm, n_pad // tn)

    if relu_bn:
        kernel = _linear_bn_relu_kernel
        extra_inputs = (scale_pad, shift_pad)
        extra_specs = [pl.BlockSpec((1, tn), lambda i, j: (0, j)),
                       pl.BlockSpec((1, tn), lambda i, j: (0, j))]
    else:
        kernel = _linear_bias_kernel
        extra_inputs = (shift_pad,)
        extra_specs = [pl.BlockSpec((1, tn), lambda i, j: (0, j))]

    cost = pl.CostEstimate(
        flops=2 * m_pad * n_pad * k_pad,
        transcendentals=0,
        bytes_accessed=(x_p.size * x_p.dtype.itemsize
                        + w_pad.size * w_pad.dtype.itemsize
                        + m_pad * n_pad * jnp.dtype(out_dtype).itemsize),
    )

    out = pl.pallas_call(
        kernel,
        out_shape=jax.ShapeDtypeStruct((m_pad, n_pad), out_dtype),
        grid=grid,
        in_specs=[pl.BlockSpec((tm, k_pad), lambda i, j: (i, 0)),   # x row-block
                  pl.BlockSpec((tn, k_pad), lambda i, j: (j, 0)),   # w row-block
                  *extra_specs],
        out_specs=pl.BlockSpec((tm, tn), lambda i, j: (i, j)),
        compiler_params=pltpu.CompilerParams(
            dimension_semantics=("parallel", "parallel"),
            vmem_limit_bytes=_VMEM_LIMIT),
        cost_estimate=cost,
    )(x_p, w_pad, *extra_inputs)

    if m_pad != m or n_pad != n_valid:
        out = out[:m, :n_valid]
    return out


def _fused2_fits(hidden, out, x_bytes, out_bytes):
    n1, k1 = hidden["w"].shape
    n2, k2 = out["w"].shape
    if k2 != n1:
        return False
    wb = hidden["w"].dtype.itemsize
    tm = 256  # worst case
    need = (2 * tm * k1 * x_bytes                 # x block (double-buffered)
            + 2 * n1 * k1 * wb + 2 * n2 * n1 * wb  # resident weights
            + 2 * tm * n2 * out_bytes             # output block
            + tm * n1 * 4                         # f32 intermediate h
            + 4 * (2 * n1 + n2))                  # scale / shift / bias
    return need <= _VMEM_BUDGET


# --------------------------------------------------------------------------
# MoBYMLP forward
# --------------------------------------------------------------------------

def prepare_moby_mlp_params(hidden_layers, out_layer, *, eps=1e-5,
                            compute_dtype=jnp.bfloat16):
    """Fold eval-mode BatchNorm1d + bias into scale/shift; pre-cast/pre-pad once.

    hidden_layers: list of dicts with keys
        w [D_out, D_in], b [D_out], gamma, beta, mean, var [D_out].
    out_layer: (w [D_out, D_in], b [D_out]) for linear_out, or None (num_layers == 0).
    """
    # TODO(synk): training-mode BatchNorm1d (batch statistics / running-stat
    # updates) is not implemented; eval-mode running statistics are used.
    prep = {"hidden": [], "out": None}
    for layer in hidden_layers:
        w = layer["w"]
        n, k = w.shape
        inv_std = lax.rsqrt(layer["var"].astype(jnp.float32) + eps)
        scale = layer["gamma"].astype(jnp.float32) * inv_std
        shift = ((layer["b"].astype(jnp.float32) - layer["mean"].astype(jnp.float32))
                 * scale + layer["beta"].astype(jnp.float32))
        n_pad, k_pad = _round_up(n, _LANE), _round_up(k, _LANE)
        prep["hidden"].append(dict(
            w=_pad2d(w.astype(compute_dtype), n_pad, k_pad),
            scale=_pad2d(scale.reshape(1, n), 1, n_pad),
            shift=_pad2d(shift.reshape(1, n), 1, n_pad),
            n=n))
    if out_layer is not None:
        w, b = out_layer
        n, k = w.shape
        n_pad, k_pad = _round_up(n, _LANE), _round_up(k, _LANE)
        prep["out"] = dict(
            w=_pad2d(w.astype(compute_dtype), n_pad, k_pad),
            b=_pad2d(b.reshape(1, n).astype(jnp.float32), 1, n_pad),
            n=n)
    return prep


def moby_mlp_forward(x, params, *, force_unfused=False):
    """MoBYMLP forward on prepared params (see prepare_moby_mlp_params)."""
    hidden = params["hidden"]
    out = params["out"]
    out_dtype = x.dtype

    if not hidden and out is None:        # num_layers == 0 -> Identity
        return x

    if (not force_unfused and len(hidden) == 1 and out is not None
            and _fused2_fits(hidden[0], out, x.dtype.itemsize,
                             jnp.dtype(out_dtype).itemsize)):
        # Standard MoBY case (num_layers == 2): one fused kernel, weights
        # resident in VMEM, intermediate never written to HBM.
        return _fused_mlp2(x, hidden[0], out, out_dtype)

    h = x
    for idx, layer in enumerate(hidden):
        is_last = (out is None and idx == len(hidden) - 1)
        # intermediate activations stay in the low-precision compute dtype
        h = _linear(h, layer["w"], layer["scale"], layer["shift"], layer["n"],
                    relu_bn=True,
                    out_dtype=out_dtype if is_last else layer["w"].dtype)
    if out is not None:
        h = _linear(h, out["w"], None, out["b"], out["n"],
                    relu_bn=False, out_dtype=out_dtype)
    return h


def _reference(x, hidden_layers, out_layer, eps=1e-5):
    """Pure-JAX f32 reference of the eval-mode MoBYMLP forward."""
    h = x
    for layer in hidden_layers:
        z = h @ layer["w"].T + layer["b"]
        z = (z - layer["mean"]) * lax.rsqrt(layer["var"] + eps) * layer["gamma"] + layer["beta"]
        h = jnp.maximum(z, 0.0)
    if out_layer is not None:
        w, b = out_layer
        h = h @ w.T + b
    return h


if __name__ == "__main__":
    # Small shapes consistent with MoBYMLP(in_dim, inner_dim, out_dim, num_layers=2).
    batch, in_dim, inner_dim, out_dim = 128, 256, 512, 256

    key = jax.random.PRNGKey(0)
    ks = jax.random.split(key, 9)

    def uniform_fan_in(k, shape, fan_in):
        bound = 1.0 / (fan_in ** 0.5)
        return jax.random.uniform(k, shape, jnp.float32, -bound, bound)

    x = jax.random.normal(ks[0], (batch, in_dim), jnp.float32)

    hidden_layers = [dict(
        w=uniform_fan_in(ks[1], (inner_dim, in_dim), in_dim),
        b=uniform_fan_in(ks[2], (inner_dim,), in_dim),
        gamma=jax.random.uniform(ks[3], (inner_dim,), jnp.float32, 0.5, 1.5),
        beta=0.1 * jax.random.normal(ks[4], (inner_dim,), jnp.float32),
        mean=0.1 * jax.random.normal(ks[5], (inner_dim,), jnp.float32),
        var=jax.random.uniform(ks[6], (inner_dim,), jnp.float32, 0.5, 1.5),
    )]
    out_layer = (
        uniform_fan_in(ks[7], (out_dim, inner_dim), inner_dim),
        uniform_fan_in(ks[8], (out_dim,), inner_dim),
    )

    params = prepare_moby_mlp_params(hidden_layers, out_layer)
    ref = _reference(x, hidden_layers, out_layer)

    # Fast path: single fused 2-layer kernel (intermediate never leaves VMEM).
    y_fused = jax.block_until_ready(moby_mlp_forward(x, params))
    # General path: chained single-K-step linear kernels (num_layers != 2 etc.).
    y_chain = jax.block_until_ready(moby_mlp_forward(x, params, force_unfused=True))

    assert y_fused.shape == (batch, out_dim), y_fused.shape
    assert y_fused.dtype == x.dtype, y_fused.dtype
    assert y_chain.shape == (batch, out_dim), y_chain.shape
    for name, y in (("fused", y_fused), ("chained", y_chain)):
        yf = y.astype(jnp.float32)
        max_err = float(jnp.max(jnp.abs(yf - ref)))
        # bf16 MXU inputs with f32 accumulation -> slightly looser tolerance.
        assert jnp.allclose(yf, ref, atol=5e-2, rtol=5e-2), \
            f"{name} mismatch vs reference, max_err={max_err}"

    print("KERNEL_OK")
</pallas_src>

<mosaic_0001>
module attributes {stable_mosaic.version = 11 : i64} {
  func.func @_fused_mlp2_kernel(%arg0: i32, %arg1: memref<64x256xf32, #tpu.memory_space<vmem>>, %arg2: memref<512x256xbf16, #tpu.memory_space<vmem>>, %arg3: memref<1x512xf32, #tpu.memory_space<vmem>>, %arg4: memref<1x512xf32, #tpu.memory_space<vmem>>, %arg5: memref<256x512xbf16, #tpu.memory_space<vmem>>, %arg6: memref<1x256xf32, #tpu.memory_space<vmem>>, %arg7: memref<64x256xf32, #tpu.memory_space<vmem>>) attributes {dimension_semantics = [#tpu.dimension_semantics<parallel>], iteration_bounds = array<i64: 2>, scalar_prefetch = 0 : i64, scratch_operands = 0 : i64, tpu.core_type = #tpu.core_type<tc>, window_params = [{transform_indices = @transform_0, window_bounds = array<i64: 64, 256>}, {pipeline_mode = #tpu.pipeline_mode<synchronous>, transform_indices = @transform_1, window_bounds = array<i64: 512, 256>}, {pipeline_mode = #tpu.pipeline_mode<synchronous>, transform_indices = @transform_2, window_bounds = array<i64: 1, 512>}, {pipeline_mode = #tpu.pipeline_mode<synchronous>, transform_indices = @transform_3, window_bounds = array<i64: 1, 512>}, {pipeline_mode = #tpu.pipeline_mode<synchronous>, transform_indices = @transform_4, window_bounds = array<i64: 256, 512>}, {pipeline_mode = #tpu.pipeline_mode<synchronous>, transform_indices = @transform_5, window_bounds = array<i64: 1, 256>}, {transform_indices = @transform_6, window_bounds = array<i64: 64, 256>}]} {
    %c0 = arith.constant 0 : index
    %c0_0 = arith.constant 0 : index
    %0 = vector.load %arg1[%c0, %c0_0] : memref<64x256xf32, #tpu.memory_space<vmem>>, vector<64x256xf32>
    %1 = arith.truncf %0 : vector<64x256xf32> to vector<64x256xbf16>
    %c0_1 = arith.constant 0 : index
    %c0_2 = arith.constant 0 : index
    %2 = vector.load %arg2[%c0_1, %c0_2] : memref<512x256xbf16, #tpu.memory_space<vmem>>, vector<512x256xbf16>
    %cst = arith.constant dense<0.000000e+00> : vector<64x512xf32>
    %3 = tpu.matmul %1, %2, %cst {dimension_numbers = #tpu.dot_dimension_numbers<[1], [1], [0], [0], [0, 0, 1, 0], [], []>} : vector<64x256xbf16>, vector<512x256xbf16>, vector<64x512xf32> -> vector<64x512xf32>
    %c0_3 = arith.constant 0 : index
    %c0_4 = arith.constant 0 : index
    %4 = vector.load %arg3[%c0_3, %c0_4] : memref<1x512xf32, #tpu.memory_space<vmem>>, vector<1x512xf32>
    %5 = vector.broadcast %4 : vector<1x512xf32> to vector<64x512xf32>
    %6 = arith.mulf %3, %5 : vector<64x512xf32>
    %c0_5 = arith.constant 0 : index
    %c0_6 = arith.constant 0 : index
    %7 = vector.load %arg4[%c0_5, %c0_6] : memref<1x512xf32, #tpu.memory_space<vmem>>, vector<1x512xf32>
    %8 = vector.broadcast %7 : vector<1x512xf32> to vector<64x512xf32>
    %9 = arith.addf %6, %8 : vector<64x512xf32>
    %cst_7 = arith.constant 0.000000e+00 : f32
    %10 = vector.broadcast %cst_7 : f32 to vector<64x512xf32>
    %11 = arith.maximumf %9, %10 : vector<64x512xf32>
    %12 = arith.truncf %11 : vector<64x512xf32> to vector<64x512xbf16>
    %c0_8 = arith.constant 0 : index
    %c0_9 = arith.constant 0 : index
    %13 = vector.load %arg5[%c0_8, %c0_9] : memref<256x512xbf16, #tpu.memory_space<vmem>>, vector<256x512xbf16>
    %cst_10 = arith.constant dense<0.000000e+00> : vector<64x256xf32>
    %14 = tpu.matmul %12, %13, %cst_10 {dimension_numbers = #tpu.dot_dimension_numbers<[1], [1], [0], [0], [0, 0, 1, 0], [], []>} : vector<64x512xbf16>, vector<256x512xbf16>, vector<64x256xf32> -> vector<64x256xf32>
    %c0_11 = arith.constant 0 : index
    %c0_12 = arith.constant 0 : index
    %15 = vector.load %arg6[%c0_11, %c0_12] : memref<1x256xf32, #tpu.memory_space<vmem>>, vector<1x256xf32>
    %16 = vector.broadcast %15 : vector<1x256xf32> to vector<64x256xf32>
    %17 = arith.addf %14, %16 : vector<64x256xf32>
    %c0_13 = arith.constant 0 : index
    %c0_14 = arith.constant 0 : index
    %18 = vector.load %arg7[%c0_13, %c0_14] : memref<64x256xf32, #tpu.memory_space<vmem>>, vector<64x256xf32>
    tpu.vector_store %arg7[%c0_13, %c0_14], %17 {strides = array<i32>} : memref<64x256xf32, #tpu.memory_space<vmem>>, vector<64x256xf32>,
    return
  }
  func.func @transform_0(%arg0: i32) -> (i32, i32) {
    %c0_i32 = arith.constant 0 : i32
    %c0_i32_0 = arith.constant 0 : i32
    return %arg0, %c0_i32 : i32, i32
  }
  func.func @transform_1(%arg0: i32) -> (i32, i32) {
    %c0_i32 = arith.constant 0 : i32
    %c0_i32_0 = arith.constant 0 : i32
    %c0_i32_1 = arith.constant 0 : i32
    return %c0_i32, %c0_i32_0 : i32, i32
  }
  func.func @transform_2(%arg0: i32) -> (i32, i32) {
    %c0_i32 = arith.constant 0 : i32
    %c0_i32_0 = arith.constant 0 : i32
    %c0_i32_1 = arith.constant 0 : i32
    return %c0_i32, %c0_i32_0 : i32, i32
  }
  func.func @transform_3(%arg0: i32) -> (i32, i32) {
    %c0_i32 = arith.constant 0 : i32
    %c0_i32_0 = arith.constant 0 : i32
    %c0_i32_1 = arith.constant 0 : i32
    return %c0_i32, %c0_i32_0 : i32, i32
  }
  func.func @transform_4(%arg0: i32) -> (i32, i32) {
    %c0_i32 = arith.constant 0 : i32
    %c0_i32_0 = arith.constant 0 : i32
    %c0_i32_1 = arith.constant 0 : i32
    return %c0_i32, %c0_i32_0 : i32, i32
  }
  func.func @transform_5(%arg0: i32) -> (i32, i32) {
    %c0_i32 = arith.constant 0 : i32
    %c0_i32_0 = arith.constant 0 : i32
    %c0_i32_1 = arith.constant 0 : i32
    return %c0_i32, %c0_i32_0 : i32, i32
  }
  func.func @transform_6(%arg0: i32) -> (i32, i32) {
    %c0_i32 = arith.constant 0 : i32
    %c0_i32_0 = arith.constant 0 : i32
    return %arg0, %c0_i32 : i32, i32
  }
}

</mosaic_0001>

<llo_original>
// kernel: tpu_custom_call.1
$region0: #{tpu_custom_call.1}
  #allocation0 [shape = 'u32[]', space=smem, size = 0x4, offset = 0x4, fixed_abs, tag = 'smem constant byte address 0x4 - core index']
  #allocation1 [shape = 'u32[144,128]{1,0:T(1,128)}', space=vmem, size = 0x12000, scoped, tag = 'internal scratch']
  %s0 = inlined_call_operand.hbm [shape: f32[128,256], index: 0, kind: input, shape index: {}]
  %s1 = inlined_call_operand.hbm [shape: bf16[512,256], index: 1, kind: input, shape index: {}]
  %s2 = inlined_call_operand.vmem [shape: f32[1,512], index: 2, kind: input, shape index: {}]
  %s3 = inlined_call_operand.vmem [shape: f32[1,512], index: 3, kind: input, shape index: {}]
  %s4 = inlined_call_operand.hbm [shape: bf16[256,512], index: 4, kind: input, shape index: {}]
  %s5 = inlined_call_operand.vmem [shape: f32[1,256], index: 5, kind: input, shape index: {}]
  %s6 = inlined_call_operand.hbm [shape: f32[128,256], index: 6, kind: output, shape index: {}]
  %s7 = sld [smem:[#allocation0]]
  $region69: #{tpu_custom_call.1} parent=0
    _
  %s9 = ssub.s32 1, %s7
  %s10 = scalar_select 0, %s9, %s7
  $region1: #{tpu_custom_call.1} parent=0
    #allocation2 [shape = 'u8[131072]{0}', space=vmem, size = 0x20000, scoped, tag = 'input window, operand 0']
    #allocation3 [shape = 's32[2]{0}', space=sflag, size = 0x8, scoped, tag = 'scoped memory for tpu_custom_call.1']
    #allocation4 [shape = 's32[2]{0}', space=sflag, size = 0x8, scoped, tag = 'scoped memory for tpu_custom_call.1']
    #allocation5 [shape = 'u8[262144]{0}', space=vmem, size = 0x40000, scoped, tag = 'input window, operand 1, single buffered']
    #allocation6 [shape = 's32[1]{0}', space=sflag, size = 0x4, scoped, tag = 'scoped memory for tpu_custom_call.1']
    #allocation7 [shape = 'u8[262144]{0}', space=vmem, size = 0x40000, scoped, tag = 'input window, operand 4, single buffered']
    #allocation8 [shape = 'u8[131072]{0}', space=vmem, size = 0x20000, scoped, tag = 'output window, operand 0']
    %11 = vsyncpa [#allocation3], 0
    %s12 = scalar_lea.sflag [#allocation3], 1
    %13 = vsyncpa %s12, 0
    %14 = vsyncpa [#allocation6], 0
    %15 = vsyncpa [#allocation4], 0
    %s16 = scalar_lea.sflag [#allocation4], 1
    %17 = vsyncpa %s16, 0
    loop: start=0, step=1, limit=4
    $region2: #{tpu_custom_call.1} parent=1 // loop_pre_header
      _
    $region3: #{tpu_custom_call.1} parent=1 // loop_header
      %s19 = sphi 0, %s23
      %p20 = scmp.ge.s32.totalorder %s19, 4
      %s29 = sphi 0, %s31
      %s32 = sphi 0, %s29
      %s33 = sphi 0, %s32
      %s49 = sphi 0, %s33
      %s53 = sphi 0, %s53
      %s55 = sphi 0, %s53
      %s56 = sphi 0, %s55
      %s70 = sphi 0, %s56
      %s74 = sphi 0, %s74
      %s76 = sphi 0, %s74
      %s77 = sphi 0, %s76
      %s91 = sphi 0, %s77
      %s95 = sphi 0, %s95
      %s97 = sphi 0, %s95
      %s98 = sphi 0, %s97
      %s112 = sphi 0, %s98
      %s116 = sphi 0, %s116
      %s118 = sphi 0, %s116
      %s119 = sphi 0, %s118
      %s133 = sphi 0, %s119
      %s137 = sphi 0, %s137
      %s139 = sphi 0, %s137
      %s140 = sphi 0, %s139
      %s154 = sphi 0, %s140
      %s160 = sphi 0, %s162
      %s163 = sphi 0, %s160
      %s164 = sphi 0, %s163
      %s180 = sphi 0, %s164
    $region4: #{tpu_custom_call.1} parent=1 // loop_header_branch
      %22 = sbr.rel (%p20) target = $region8
    $region5: #{tpu_custom_call.1} parent=1 // loop_body
      %s24 = ssub.s32 %s19, 1
      %s25 = ssub.s32 %s19, 2
      %s26 = sadd.s32 %s19, 1
      %s27 = ssub.s32 %s19, %s26
      %p28 = scmp.eq.s32.totalorder %s27, 0
      %s30 = sadd.s32 %s29, 1
      %s31 = scalar_select %p28, %s29, %s30
      %p34 = pneg %p28
      %p35 = scmp.eq.s32.totalorder %s19, 1
      %p36 = por %p34, %p35
      %p37 = scmp.ne.s32.totalorder %s29, %s32
      %p38 = scmp.eq.s32.totalorder %s19, 0
      %p39 = por %p37, %p38
      %p40 = scmp.ne.s32.totalorder %s29, %s32
      %p41 = scmp.eq.s32.totalorder %s24, 1
      %p42 = por %p40, %p41
      %p43 = scmp.ne.s32.totalorder %s32, %s33
      %p44 = scmp.eq.s32.totalorder %s24, 0
      %p45 = por %p43, %p44
      %p46 = scmp.ne.s32.totalorder %s32, %s33
      %p47 = scmp.eq.s32.totalorder %s25, 1
      %p48 = por %p46, %p47
      %p50 = scmp.ne.s32.totalorder %s33, %s49
      %p51 = scmp.eq.s32.totalorder %s25, 0
      %p52 = por %p50, %p51
      %s54 = sadd.s32 %s53, 1
      %p57 = scmp.eq.s32.totalorder %s19, 1
      %p58 = scmp.ne.s32.totalorder %s53, %s55
      %p59 = scmp.eq.s32.totalorder %s19, 0
      %p60 = por %p58, %p59
      %p61 = scmp.ne.s32.totalorder %s53, %s55
      %p62 = scmp.eq.s32.totalorder %s24, 1
      %p63 = por %p61, %p62
      %p64 = scmp.ne.s32.totalorder %s55, %s56
      %p65 = scmp.eq.s32.totalorder %s24, 0
      %p66 = por %p64, %p65
      %p67 = scmp.ne.s32.totalorder %s55, %s56
      %p68 = scmp.eq.s32.totalorder %s25, 1
      %p69 = por %p67, %p68
      %p71 = scmp.ne.s32.totalorder %s56, %s70
      %p72 = scmp.eq.s32.totalorder %s25, 0
      %p73 = por %p71, %p72
      %s75 = sadd.s32 %s74, 1
      %p78 = scmp.eq.s32.totalorder %s19, 1
      %p79 = scmp.ne.s32.totalorder %s74, %s76
      %p80 = scmp.eq.s32.totalorder %s19, 0
      %p81 = por %p79, %p80
      %p82 = scmp.ne.s32.totalorder %s74, %s76
      %p83 = scmp.eq.s32.totalorder %s24, 1
      %p84 = por %p82, %p83
      %p85 = scmp.ne.s32.totalorder %s76, %s77
      %p86 = scmp.eq.s32.totalorder %s24, 0
      %p87 = por %p85, %p86
      %p88 = scmp.ne.s32.totalorder %s76, %s77
      %p89 = scmp.eq.s32.totalorder %s25, 1
      %p90 = por %p88, %p89
      %p92 = scmp.ne.s32.totalorder %s77, %s91
      %p93 = scmp.eq.s32.totalorder %s25, 0
      %p94 = por %p92, %p93
      %s96 = sadd.s32 %s95, 1
      %p99 = scmp.eq.s32.totalorder %s19, 1
      %p100 = scmp.ne.s32.totalorder %s95, %s97
      %p101 = scmp.eq.s32.totalorder %s19, 0
      %p102 = por %p100, %p101
      %p103 = scmp.ne.s32.totalorder %s95, %s97
      %p104 = scmp.eq.s32.totalorder %s24, 1
      %p105 = por %p103, %p104
      %p106 = scmp.ne.s32.totalorder %s97, %s98
      %p107 = scmp.eq.s32.totalorder %s24, 0
      %p108 = por %p106, %p107
      %p109 = scmp.ne.s32.totalorder %s97, %s98
      %p110 = scmp.eq.s32.totalorder %s25, 1
      %p111 = por %p109, %p110
      %p113 = scmp.ne.s32.totalorder %s98, %s112
      %p114 = scmp.eq.s32.totalorder %s25, 0
      %p115 = por %p113, %p114
      %s117 = sadd.s32 %s116, 1
      %p120 = scmp.eq.s32.totalorder %s19, 1
      %p121 = scmp.ne.s32.totalorder %s116, %s118
      %p122 = scmp.eq.s32.totalorder %s19, 0
      %p123 = por %p121, %p122
      %p124 = scmp.ne.s32.totalorder %s116, %s118
      %p125 = scmp.eq.s32.totalorder %s24, 1
      %p126 = por %p124, %p125
      %p127 = scmp.ne.s32.totalorder %s118, %s119
      %p128 = scmp.eq.s32.totalorder %s24, 0
      %p129 = por %p127, %p128
      %p130 = scmp.ne.s32.totalorder %s118, %s119
      %p131 = scmp.eq.s32.totalorder %s25, 1
      %p132 = por %p130, %p131
      %p134 = scmp.ne.s32.totalorder %s119, %s133
      %p135 = scmp.eq.s32.totalorder %s25, 0
      %p136 = por %p134, %p135
      %s138 = sadd.s32 %s137, 1
      %p141 = scmp.eq.s32.totalorder %s19, 1
      %p142 = scmp.ne.s32.totalorder %s137, %s139
      %p143 = scmp.eq.s32.totalorder %s19, 0
      %p144 = por %p142, %p143
      %p145 = scmp.ne.s32.totalorder %s137, %s139
      %p146 = scmp.eq.s32.totalorder %s24, 1
      %p147 = por %p145, %p146
      %p148 = scmp.ne.s32.totalorder %s139, %s140
      %p149 = scmp.eq.s32.totalorder %s24, 0
      %p150 = por %p148, %p149
      %p151 = scmp.ne.s32.totalorder %s139, %s140
      %p152 = scmp.eq.s32.totalorder %s25, 1
      %p153 = por %p151, %p152
      %p155 = scmp.ne.s32.totalorder %s140, %s154
      %p156 = scmp.eq.s32.totalorder %s25, 0
      %p157 = por %p155, %p156
      %s158 = ssub.s32 %s19, %s26
      %p159 = scmp.eq.s32.totalorder %s158, 0
      %s161 = sadd.s32 %s160, 1
      %s162 = scalar_select %p159, %s160, %s161
      %p165 = pneg %p159
      %p166 = scmp.eq.s32.totalorder %s19, 1
      %p167 = por %p165, %p166
      %p168 = scmp.ne.s32.totalorder %s160, %s163
      %p169 = scmp.eq.s32.totalorder %s19, 0
      %p170 = por %p168, %p169
      %p171 = scmp.ne.s32.totalorder %s160, %s163
      %p172 = scmp.eq.s32.totalorder %s24, 1
      %p173 = por %p171, %p172
      %p174 = scmp.ne.s32.totalorder %s163, %s164
      %p175 = scmp.eq.s32.totalorder %s24, 0
      %p176 = por %p174, %p175
      %p177 = scmp.ne.s32.totalorder %s163, %s164
      %p178 = scmp.eq.s32.totalorder %s25, 1
      %p179 = por %p177, %p178
      %p181 = scmp.ne.s32.totalorder %s164, %s180
      %p182 = scmp.eq.s32.totalorder %s25, 0
      %p183 = por %p181, %p182
      %p184 = scmp.le.s32.totalorder 1, %s19
      %p185 = scmp.lt.s32.totalorder %s19, 3
      %p186 = pnand %p184, %p185
      %p187 = pneg %p186
      // Predicated region
      $region9: #{tpu_custom_call.1} parent=5 // pred_check
        _
      $region10: #{tpu_custom_call.1} parent=5 // pred_check_branch
        %189 = sbr.rel (%p186) target = $region12
      $region11: #{tpu_custom_call.1} parent=5 // pred_region
        %s190 = ssub.s32 %s19, 1
        // Predicated region
        $region13: #{tpu_custom_call.1} parent=11 // pred_check
          %p191 = pneg %p66
        $region14: #{tpu_custom_call.1} parent=11 // pred_check_branch
          %193 = sbr.rel (%p191) target = $region16
        $region15: #{tpu_custom_call.1} parent=11 // pred_region
          %s195 = ssub.s32 8192, 8192
          %196 = vsyncadd [#allocation6], %s195
          %s197 = sshll.u32 [#allocation5], 4
          %s198 = int_to_ptr.vmem [resolvable:$true] %s197
          %203 = dma.hbm_to_vmem [thread:$0]  %s1, 8192, %s198, [#allocation6], 128, 128, 8
        $region16: #{tpu_custom_call.1} parent=11 // pred_fallthru
          _
        // Predicated region
        $region17: #{tpu_custom_call.1} parent=11 // pred_check
          %p204 = pneg %p87
        $region18: #{tpu_custom_call.1} parent=11 // pred_check_branch
          %206 = sbr.rel (%p204) target = $region20
        $region19: #{tpu_custom_call.1} parent=11 // pred_region
          _
        $region20: #{tpu_custom_call.1} parent=11 // pred_fallthru
          _
        // Predicated region
        $region21: #{tpu_custom_call.1} parent=11 // pred_check
          %p207 = pneg %p108
        $region22: #{tpu_custom_call.1} parent=11 // pred_check_branch
          %209 = sbr.rel (%p207) target = $region24
        $region23: #{tpu_custom_call.1} parent=11 // pred_region
          _
        $region24: #{tpu_custom_call.1} parent=11 // pred_fallthru
          _
        // Predicated region
        $region25: #{tpu_custom_call.1} parent=11 // pred_check
          %p210 = pneg %p129
        $region26: #{tpu_custom_call.1} parent=11 // pred_check_branch
          %212 = sbr.rel (%p210) target = $region28
        $region27: #{tpu_custom_call.1} parent=11 // pred_region
          %s214 = ssub.s32 8192, 8192
          %215 = vsyncadd [#allocation6], %s214
          %s216 = sshll.u32 [#allocation7], 4
          %s217 = int_to_ptr.vmem [resolvable:$true] %s216
          %222 = dma.hbm_to_vmem [thread:$0]  %s4, 8192, %s217, [#allocation6], 256, 256, 16
        $region28: #{tpu_custom_call.1} parent=11 // pred_fallthru
          _
        // Predicated region
        $region29: #{tpu_custom_call.1} parent=11 // pred_check
          %p223 = pneg %p150
        $region30: #{tpu_custom_call.1} parent=11 // pred_check_branch
          %225 = sbr.rel (%p223) target = $region32
        $region31: #{tpu_custom_call.1} parent=11 // pred_region
          _
        $region32: #{tpu_custom_call.1} parent=11 // pred_fallthru
          _
      $region12: #{tpu_custom_call.1} parent=5 // pred_fallthru
        _
      %p226 = scmp.lt.s32.totalorder %s19, 2
      // Predicated region
      $region33: #{tpu_custom_call.1} parent=5 // pred_check
        %p227 = pneg %p226
      $region34: #{tpu_custom_call.1} parent=5 // pred_check_branch
        %229 = sbr.rel (%p227) target = $region36
      $region35: #{tpu_custom_call.1} parent=5 // pred_region
        // Predicated region
        $region37: #{tpu_custom_call.1} parent=35 // pred_check
          %p230 = pneg %p39
        $region38: #{tpu_custom_call.1} parent=35 // pred_check_branch
          %232 = sbr.rel (%p230) target = $region40
        $region39: #{tpu_custom_call.1} parent=35 // pred_region
          %s233 = sand.u32 %s29, 1
          %s234 = scalar_lea.sflag [#allocation3], %s233
          %s235 = sand.u32 %s29, 1
          %s236 = smul.addr %s235, 128
          %s237 = scalar_lea.vmem [#allocation2], %s236
          %s238 = smul.u32 8, %s19
          %s240 = ssub.s32 2048, 2048
          %241 = vsyncadd %s234, %s240
          %s242 = smul.addr %s238, 2
          %s243 = smul.addr %s242, 128
          %s244 = scalar_lea.hbm %s0, %s243
          %s245 = sshll.u32 %s237, 4
          %s246 = int_to_ptr.vmem [resolvable:$true] %s245
          %251 = dma.hbm_to_vmem [thread:$0]  %s244, 2048, %s246, %s234, 256, 256, 16
        $region40: #{tpu_custom_call.1} parent=35 // pred_fallthru
          _
      $region36: #{tpu_custom_call.1} parent=5 // pred_fallthru
        _
      %p252 = scmp.le.s32.totalorder 1, %s19
      %p253 = scmp.lt.s32.totalorder %s19, 3
      %p254 = pnand %p252, %p253
      %p255 = pneg %p254
      // Predicated region
      $region41: #{tpu_custom_call.1} parent=5 // pred_check
        _
      $region42: #{tpu_custom_call.1} parent=5 // pred_check_branch
        %257 = sbr.rel (%p254) target = $region44
      $region43: #{tpu_custom_call.1} parent=5 // pred_region
        %s258 = ssub.s32 %s19, 1
        %s259 = sand.u32 %s32, 1
        %s260 = scalar_lea.sflag [#allocation3], %s259
        %s261 = sand.u32 %s32, 1
        %s262 = smul.addr %s261, 128
        %s263 = scalar_lea.vmem [#allocation2], %s262
        // Predicated region
        $region45: #{tpu_custom_call.1} parent=43 // pred_check
          %p264 = pneg %p45
        $region46: #{tpu_custom_call.1} parent=43 // pred_check_branch
          %266 = sbr.rel (%p264) target = $region48
        $region47: #{tpu_custom_call.1} parent=43 // pred_region
          %267 = dma.done %s260, 2048
        $region48: #{tpu_custom_call.1} parent=43 // pred_fallthru
          _
        // Predicated region
        $region49: #{tpu_custom_call.1} parent=43 // pred_check
          %p268 = pneg %p66
        $region50: #{tpu_custom_call.1} parent=43 // pred_check_branch
          %270 = sbr.rel (%p268) target = $region52
        $region51: #{tpu_custom_call.1} parent=43 // pred_region
          %271 = dma.done [#allocation6], 8192
        $region52: #{tpu_custom_call.1} parent=43 // pred_fallthru
          _
        // Predicated region
        $region53: #{tpu_custom_call.1} parent=43 // pred_check
          %p272 = pneg %p129
        $region54: #{tpu_custom_call.1} parent=43 // pred_check_branch
          %274 = sbr.rel (%p272) target = $region56
        $region55: #{tpu_custom_call.1} parent=43 // pred_region
          %275 = dma.done [#allocation6], 8192
        $region56: #{tpu_custom_call.1} parent=43 // pred_fallthru
          _
        %s276 = sand.u32 %s32, 1
        %s277 = scalar_lea.sflag [#allocation3], %s276
        %s278 = sand.u32 %s32, 1
        %s279 = smul.addr %s278, 128
        %s280 = scalar_lea.vmem [#allocation2], %s279
        %p281 = pneg %p45
        %p282 = pneg %p42
        %p283 = pneg %p66
        %p284 = pneg %p63
        %p285 = pneg %p87
        %p286 = pneg %p84
        %p287 = pneg %p108
        %p288 = pneg %p105
        %p289 = pneg %p129
        %p290 = pneg %p126
        %p291 = pneg %p150
        %p292 = pneg %p147
        %p293 = pneg %p176
        %p294 = pneg %p173
        %s295 = sand.u32 %s163, 1
        %s296 = scalar_lea.sflag [#allocation4], %s295
        %s297 = sand.u32 %s163, 1
        %s298 = smul.addr %s297, 128
        %s299 = scalar_lea.vmem [#allocation8], %s298
        %s300 = smul.u32 8, %s24
        %s301 = smul.u32 8, %s24
        %v302 = vld [vmem:[%s263] sm:$0xff]
        %v303 = vld [vmem:[%s263 + $0x8] sm:$0xff]
        %v304 = vld [vmem:[%s263 + $0x10] sm:$0xff]
        %v305 = vld [vmem:[%s263 + $0x18] sm:$0xff]
        %v306 = vld [vmem:[%s263 + $0x20] sm:$0xff]
        %v307 = vld [vmem:[%s263 + $0x28] sm:$0xff]
        %v308 = vld [vmem:[%s263 + $0x30] sm:$0xff]
        %v309 = vld [vmem:[%s263 + $0x38] sm:$0xff]
        %v310 = vld [vmem:[%s263 + $0x40] sm:$0xff]
        %v311 = vld [vmem:[%s263 + $0x48] sm:$0xff]
        %v312 = vld [vmem:[%s263 + $0x50] sm:$0xff]
        %v313 = vld [vmem:[%s263 + $0x58] sm:$0xff]
        %v314 = vld [vmem:[%s263 + $0x60] sm:$0xff]
        %v315 = vld [vmem:[%s263 + $0x68] sm:$0xff]
        %v316 = vld [vmem:[%s263 + $0x70] sm:$0xff]
        %v317 = vld [vmem:[%s263 + $0x78] sm:$0xff]
        %v318 = vpack.c.bf16 %v304, %v302
        %v319 = vpack.c.bf16 %v305, %v303
        %v320 = vpack.c.bf16 %v308, %v306
        %v321 = vpack.c.bf16 %v309, %v307
        %v322 = vpack.c.bf16 %v312, %v310
        %v323 = vpack.c.bf16 %v313, %v311
        %v324 = vpack.c.bf16 %v316, %v314
        %v325 = vpack.c.bf16 %v317, %v315
        %v326 = vld [vmem:[#allocation5] sm:$0xff]
        %v327 = vld [vmem:[#allocation5 + $0x8] sm:$0xff]
        %v328 = vld [vmem:[#allocation5 + $0x10] sm:$0xff]
        %v329 = vld [vmem:[#allocation5 + $0x18] sm:$0xff]
        %v330 = vld [vmem:[#allocation5 + $0x20] sm:$0xff]
        %v331 = vld [vmem:[#allocation5 + $0x28] sm:$0xff]
        %v332 = vld [vmem:[#allocation5 + $0x30] sm:$0xff]
        %v333 = vld [vmem:[#allocation5 + $0x38] sm:$0xff]
        %v334 = vld [vmem:[#allocation5 + $0x40] sm:$0xff]
        %v335 = vld [vmem:[#allocation5 + $0x48] sm:$0xff]
        %v336 = vld [vmem:[#allocation5 + $0x50] sm:$0xff]
        %v337 = vld [vmem:[#allocation5 + $0x58] sm:$0xff]
        %v338 = vld [vmem:[#allocation5 + $0x60] sm:$0xff]
        %v339 = vld [vmem:[#allocation5 + $0x68] sm:$0xff]
        %v340 = vld [vmem:[#allocation5 + $0x70] sm:$0xff]
        %v341 = vld [vmem:[#allocation5 + $0x78] sm:$0xff]
        %v342 = vld [vmem:[#allocation5 + $0x80] sm:$0xff]
        %v343 = vld [vmem:[#allocation5 + $0x88] sm:$0xff]
        %v344 = vld [vmem:[#allocation5 + $0x90] sm:$0xff]
        %v345 = vld [vmem:[#allocation5 + $0x98] sm:$0xff]
        %v346 = vld [vmem:[#allocation5 + $0xa0] sm:$0xff]
        %v347 = vld [vmem:[#allocation5 + $0xa8] sm:$0xff]
        %v348 = vld [vmem:[#allocation5 + $0xb0] sm:$0xff]
        %v349 = vld [vmem:[#allocation5 + $0xb8] sm:$0xff]
        %v350 = vld [vmem:[#allocation5 + $0xc0] sm:$0xff]
        %v351 = vld [vmem:[#allocation5 + $0xc8] sm:$0xff]
        %v352 = vld [vmem:[#allocation5 + $0xd0] sm:$0xff]
        %v353 = vld [vmem:[#allocation5 + $0xd8] sm:$0xff]
        %v354 = vld [vmem:[#allocation5 + $0xe0] sm:$0xff]
        %v355 = vld [vmem:[#allocation5 + $0xe8] sm:$0xff]
        %v356 = vld [vmem:[#allocation5 + $0xf0] sm:$0xff]
        %v357 = vld [vmem:[#allocation5 + $0xf8] sm:$0xff]
        %v358 = vld [vmem:[#allocation5 + $0x100] sm:$0xff]
        %v359 = vld [vmem:[#allocation5 + $0x108] sm:$0xff]
        %v360 = vld [vmem:[#allocation5 + $0x110] sm:$0xff]
        %v361 = vld [vmem:[#allocation5 + $0x118] sm:$0xff]
        %v362 = vld [vmem:[#allocation5 + $0x120] sm:$0xff]
        %v363 = vld [vmem:[#allocation5 + $0x128] sm:$0xff]
        %v364 = vld [vmem:[#allocation5 + $0x130] sm:$0xff]
        %v365 = vld [vmem:[#allocation5 + $0x138] sm:$0xff]
        %v366 = vld [vmem:[#allocation5 + $0x140] sm:$0xff]
        %v367 = vld [vmem:[#allocation5 + $0x148] sm:$0xff]
        %v368 = vld [vmem:[#allocation5 + $0x150] sm:$0xff]
        %v369 = vld [vmem:[#allocation5 + $0x158] sm:$0xff]
        %v370 = vld [vmem:[#allocation5 + $0x160] sm:$0xff]
        %v371 = vld [vmem:[#allocation5 + $0x168] sm:$0xff]
        %v372 = vld [vmem:[#allocation5 + $0x170] sm:$0xff]
        %v373 = vld [vmem:[#allocation5 + $0x178] sm:$0xff]
        %v374 = vld [vmem:[#allocation5 + $0x180] sm:$0xff]
        %v375 = vld [vmem:[#allocation5 + $0x188] sm:$0xff]
        %v376 = vld [vmem:[#allocation5 + $0x190] sm:$0xff]
        %v377 = vld [vmem:[#allocation5 + $0x198] sm:$0xff]
        %v378 = vld [vmem:[#allocation5 + $0x1a0] sm:$0xff]
        %v379 = vld [vmem:[#allocation5 + $0x1a8] sm:$0xff]
        %v380 = vld [vmem:[#allocation5 + $0x1b0] sm:$0xff]
        %v381 = vld [vmem:[#allocation5 + $0x1b8] sm:$0xff]
        %v382 = vld [vmem:[#allocation5 + $0x1c0] sm:$0xff]
        %v383 = vld [vmem:[#allocation5 + $0x1c8] sm:$0xff]
        %v384 = vld [vmem:[#allocation5 + $0x1d0] sm:$0xff]
        %v385 = vld [vmem:[#allocation5 + $0x1d8] sm:$0xff]
        %v386 = vld [vmem:[#allocation5 + $0x1e0] sm:$0xff]
        %v387 = vld [vmem:[#allocation5 + $0x1e8] sm:$0xff]
        %v388 = vld [vmem:[#allocation5 + $0x1f0] sm:$0xff]
        %v389 = vld [vmem:[#allocation5 + $0x1f8] sm:$0xff]
        %v454 = vunpack.c.l.b16 %v326
        %v455 = vunpack.c.h.b16 %v326
        %v456 = vunpack.c.l.b16 %v327
        %v457 = vunpack.c.h.b16 %v327
        %v458 = vunpack.c.l.b16 %v328
        %v459 = vunpack.c.h.b16 %v328
        %v460 = vunpack.c.l.b16 %v329
        %v461 = vunpack.c.h.b16 %v329
        %v462 = vunpack.c.l.b16 %v330
        %v463 = vunpack.c.h.b16 %v330
        %v464 = vunpack.c.l.b16 %v331
        %v465 = vunpack.c.h.b16 %v331
        %v466 = vunpack.c.l.b16 %v332
        %v467 = vunpack.c.h.b16 %v332
        %v468 = vunpack.c.l.b16 %v333
        %v469 = vunpack.c.h.b16 %v333
        %v470 = vunpack.c.l.b16 %v334
        %v471 = vunpack.c.h.b16 %v334
        %v472 = vunpack.c.l.b16 %v335
        %v473 = vunpack.c.h.b16 %v335
        %v474 = vunpack.c.l.b16 %v336
        %v475 = vunpack.c.h.b16 %v336
        %v476 = vunpack.c.l.b16 %v337
        %v477 = vunpack.c.h.b16 %v337
        %v478 = vunpack.c.l.b16 %v338
        %v479 = vunpack.c.h.b16 %v338
        %v480 = vunpack.c.l.b16 %v339
        %v481 = vunpack.c.h.b16 %v339
        %v482 = vunpack.c.l.b16 %v340
        %v483 = vunpack.c.h.b16 %v340
        %v484 = vunpack.c.l.b16 %v341
        %v485 = vunpack.c.h.b16 %v341
        %v486 = vunpack.c.l.b16 %v342
        %v487 = vunpack.c.h.b16 %v342
        %v488 = vunpack.c.l.b16 %v343
        %v489 = vunpack.c.h.b16 %v343
        %v490 = vunpack.c.l.b16 %v344
        %v491 = vunpack.c.h.b16 %v344
        %v492 = vunpack.c.l.b16 %v345
        %v493 = vunpack.c.h.b16 %v345
        %v494 = vunpack.c.l.b16 %v346
        %v495 = vunpack.c.h.b16 %v346
        %v496 = vunpack.c.l.b16 %v347
        %v497 = vunpack.c.h.b16 %v347
        %v498 = vunpack.c.l.b16 %v348
        %v499 = vunpack.c.h.b16 %v348
        %v500 = vunpack.c.l.b16 %v349
        %v501 = vunpack.c.h.b16 %v349
        %v502 = vunpack.c.l.b16 %v350
        %v503 = vunpack.c.h.b16 %v350
        %v504 = vunpack.c.l.b16 %v351
        %v505 = vunpack.c.h.b16 %v351
        %v506 = vunpack.c.l.b16 %v352
        %v507 = vunpack.c.h.b16 %v352
        %v508 = vunpack.c.l.b16 %v353
        %v509 = vunpack.c.h.b16 %v353
        %v510 = vunpack.c.l.b16 %v354
        %v511 = vunpack.c.h.b16 %v354
        %v512 = vunpack.c.l.b16 %v355
        %v513 = vunpack.c.h.b16 %v355
        %v514 = vunpack.c.l.b16 %v356
        %v515 = vunpack.c.h.b16 %v356
        %v516 = vunpack.c.l.b16 %v357
        %v517 = vunpack.c.h.b16 %v357
        %v518 = vunpack.c.l.b16 %v358
        %v519 = vunpack.c.h.b16 %v358
        %v520 = vunpack.c.l.b16 %v359
        %v521 = vunpack.c.h.b16 %v359
        %v522 = vunpack.c.l.b16 %v360
        %v523 = vunpack.c.h.b16 %v360
        %v524 = vunpack.c.l.b16 %v361
        %v525 = vunpack.c.h.b16 %v361
        %v526 = vunpack.c.l.b16 %v362
        %v527 = vunpack.c.h.b16 %v362
        %v528 = vunpack.c.l.b16 %v363
        %v529 = vunpack.c.h.b16 %v363
        %v530 = vunpack.c.l.b16 %v364
        %v531 = vunpack.c.h.b16 %v364
        %v532 = vunpack.c.l.b16 %v365
        %v533 = vunpack.c.h.b16 %v365
        %v534 = vunpack.c.l.b16 %v366
        %v535 = vunpack.c.h.b16 %v366
        %v536 = vunpack.c.l.b16 %v367
        %v537 = vunpack.c.h.b16 %v367
        %v538 = vunpack.c.l.b16 %v368
        %v539 = vunpack.c.h.b16 %v368
        %v540 = vunpack.c.l.b16 %v369
        %v541 = vunpack.c.h.b16 %v369
        %v542 = vunpack.c.l.b16 %v370
        %v543 = vunpack.c.h.b16 %v370
        %v544 = vunpack.c.l.b16 %v371
        %v545 = vunpack.c.h.b16 %v371
        %v546 = vunpack.c.l.b16 %v372
        %v547 = vunpack.c.h.b16 %v372
        %v548 = vunpack.c.l.b16 %v373
        %v549 = vunpack.c.h.b16 %v373
        %v550 = vunpack.c.l.b16 %v374
        %v551 = vunpack.c.h.b16 %v374
        %v552 = vunpack.c.l.b16 %v375
        %v553 = vunpack.c.h.b16 %v375
        %v554 = vunpack.c.l.b16 %v376
        %v555 = vunpack.c.h.b16 %v376
        %v556 = vunpack.c.l.b16 %v377
        %v557 = vunpack.c.h.b16 %v377
        %v558 = vunpack.c.l.b16 %v378
        %v559 = vunpack.c.h.b16 %v378
        %v560 = vunpack.c.l.b16 %v379
        %v561 = vunpack.c.h.b16 %v379
        %v562 = vunpack.c.l.b16 %v380
        %v563 = vunpack.c.h.b16 %v380
        %v564 = vunpack.c.l.b16 %v381
        %v565 = vunpack.c.h.b16 %v381
        %v566 = vunpack.c.l.b16 %v382
        %v567 = vunpack.c.h.b16 %v382
        %v568 = vunpack.c.l.b16 %v383
        %v569 = vunpack.c.h.b16 %v383
        %v570 = vunpack.c.l.b16 %v384
        %v571 = vunpack.c.h.b16 %v384
        %v572 = vunpack.c.l.b16 %v385
        %v573 = vunpack.c.h.b16 %v385
        %v574 = vunpack.c.l.b16 %v386
        %v575 = vunpack.c.h.b16 %v386
        %v576 = vunpack.c.l.b16 %v387
        %v577 = vunpack.c.h.b16 %v387
        %v578 = vunpack.c.l.b16 %v388
        %v579 = vunpack.c.h.b16 %v388
        %v580 = vunpack.c.l.b16 %v389
        %v581 = vunpack.c.h.b16 %v389
        %v582 = vpack.c.b16 %v456, %v454
        %v583 = vpack.c.b16 %v457, %v455
        %v584 = vpack.c.b16 %v460, %v458
        %v585 = vpack.c.b16 %v461, %v459
        %v586 = vpack.c.b16 %v464, %v462
        %v587 = vpack.c.b16 %v465, %v463
        %v588 = vpack.c.b16 %v468, %v466
        %v589 = vpack.c.b16 %v469, %v467
        %v590 = vpack.c.b16 %v472, %v470
        %v591 = vpack.c.b16 %v473, %v471
        %v592 = vpack.c.b16 %v476, %v474
        %v593 = vpack.c.b16 %v477, %v475
        %v594 = vpack.c.b16 %v480, %v478
        %v595 = vpack.c.b16 %v481, %v479
        %v596 = vpack.c.b16 %v484, %v482
        %v597 = vpack.c.b16 %v485, %v483
        %v598 = vpack.c.b16 %v488, %v486
        %v599 = vpack.c.b16 %v489, %v487
        %v600 = vpack.c.b16 %v492, %v490
        %v601 = vpack.c.b16 %v493, %v491
        %v602 = vpack.c.b16 %v496, %v494
        %v603 = vpack.c.b16 %v497, %v495
        %v604 = vpack.c.b16 %v500, %v498
        %v605 = vpack.c.b16 %v501, %v499
        %v606 = vpack.c.b16 %v504, %v502
        %v607 = vpack.c.b16 %v505, %v503
        %v608 = vpack.c.b16 %v508, %v506
        %v609 = vpack.c.b16 %v509, %v507
        %v610 = vpack.c.b16 %v512, %v510
        %v611 = vpack.c.b16 %v513, %v511
        %v612 = vpack.c.b16 %v516, %v514
        %v613 = vpack.c.b16 %v517, %v515
        %v614 = vpack.c.b16 %v520, %v518
        %v615 = vpack.c.b16 %v521, %v519
        %v616 = vpack.c.b16 %v524, %v522
        %v617 = vpack.c.b16 %v525, %v523
        %v618 = vpack.c.b16 %v528, %v526
        %v619 = vpack.c.b16 %v529, %v527
        %v620 = vpack.c.b16 %v532, %v530
        %v621 = vpack.c.b16 %v533, %v531
        %v622 = vpack.c.b16 %v536, %v534
        %v623 = vpack.c.b16 %v537, %v535
        %v624 = vpack.c.b16 %v540, %v538
        %v625 = vpack.c.b16 %v541, %v539
        %v626 = vpack.c.b16 %v544, %v542
        %v627 = vpack.c.b16 %v545, %v543
        %v628 = vpack.c.b16 %v548, %v546
        %v629 = vpack.c.b16 %v549, %v547
        %v630 = vpack.c.b16 %v552, %v550
        %v631 = vpack.c.b16 %v553, %v551
        %v632 = vpack.c.b16 %v556, %v554
        %v633 = vpack.c.b16 %v557, %v555
        %v634 = vpack.c.b16 %v560, %v558
        %v635 = vpack.c.b16 %v561, %v559
        %v636 = vpack.c.b16 %v564, %v562
        %v637 = vpack.c.b16 %v565, %v563
        %v638 = vpack.c.b16 %v568, %v566
        %v639 = vpack.c.b16 %v569, %v567
        %v640 = vpack.c.b16 %v572, %v570
        %v641 = vpack.c.b16 %v573, %v571
        %v642 = vpack.c.b16 %v576, %v574
        %v643 = vpack.c.b16 %v577, %v575
        %v644 = vpack.c.b16 %v580, %v578
        %v645 = vpack.c.b16 %v581, %v579
        %710 = vmatprep.subr.bf16.mxu0 %v583
        %711 = vmatpush1.bf16.xpose.msra.mxu0 %v582
        %712 = vmatprep.subr.bf16.mxu0 %v585
        %713 = vmatpush1.bf16.xpose.msra.mxu0 %v584
        %714 = vmatprep.subr.bf16.mxu0 %v587
        %715 = vmatpush1.bf16.xpose.msra.mxu0 %v586
        %716 = vmatprep.subr.bf16.mxu0 %v589
        %717 = vmatpush1.bf16.xpose.msra.mxu0 %v588
        %718 = vmatprep.subr.bf16.mxu0 %v591
        %719 = vmatpush1.bf16.xpose.msra.mxu0 %v590
        %720 = vmatprep.subr.bf16.mxu0 %v593
        %721 = vmatpush1.bf16.xpose.msra.mxu0 %v592
        %722 = vmatprep.subr.bf16.mxu0 %v595
        %723 = vmatpush1.bf16.xpose.msra.mxu0 %v594
        %724 = vmatprep.subr.bf16.mxu0 %v597
        %725 = vmatpush1.bf16.xpose.msra.mxu0 %v596
        %726 = vmatprep.subr.bf16.mxu0 %v599
        %727 = vmatpush1.bf16.xpose.msra.mxu0 %v598
        %728 = vmatprep.subr.bf16.mxu0 %v601
        %729 = vmatpush1.bf16.xpose.msra.mxu0 %v600
        %730 = vmatprep.subr.bf16.mxu0 %v603
        %731 = vmatpush1.bf16.xpose.msra.mxu0 %v602
        %732 = vmatprep.subr.bf16.mxu0 %v605
        %733 = vmatpush1.bf16.xpose.msra.mxu0 %v604
        %734 = vmatprep.subr.bf16.mxu0 %v607
        %735 = vmatpush1.bf16.xpose.msra.mxu0 %v606
        %736 = vmatprep.subr.bf16.mxu0 %v609
        %737 = vmatpush1.bf16.xpose.msra.mxu0 %v608
        %738 = vmatprep.subr.bf16.mxu0 %v611
        %739 = vmatpush1.bf16.xpose.msra.mxu0 %v610
        %740 = vmatprep.subr.bf16.mxu0 %v613
        %741 = vmatpush1.bf16.xpose.msra.mxu0 %v612
        %742 = vmatprep.mubr.bf16.mxu0 %v319
        %743 = vmatmul.mubr.bf16.gmra.mrb[0].mxu0 %v318
        %v744 = vpop.f32.mrb[0].mxu0
        %v745 = vadd.f32 0.0, %v744
        %v746 = vpop.f32.mrb[0].mxu0
        %v747 = vadd.f32 0.0, %v746
        %v748 = vpop.f32.mrb[0].mxu0
        %v749 = vadd.f32 0.0, %v748
        %v750 = vpop.f32.mrb[0].mxu0
        %v751 = vadd.f32 0.0, %v750
        %752 = vmatprep.mubr.bf16.mxu0 %v321
        %753 = vmatmul.mubr.bf16.gmra.mrb[0].mxu0 %v320
        %v754 = vpop.f32.mrb[0].mxu0
        %v755 = vadd.f32 0.0, %v754
        %v756 = vpop.f32.mrb[0].mxu0
        %v757 = vadd.f32 0.0, %v756
        %v758 = vpop.f32.mrb[0].mxu0
        %v759 = vadd.f32 0.0, %v758
        %v760 = vpop.f32.mrb[0].mxu0
        %v761 = vadd.f32 0.0, %v760
        %762 = vmatprep.mubr.bf16.mxu0 %v323
        %763 = vmatmul.mubr.bf16.gmra.mrb[0].mxu0 %v322
        %v764 = vpop.f32.mrb[0].mxu0
        %v765 = vadd.f32 0.0, %v764
        %v766 = vpop.f32.mrb[0].mxu0
        %v767 = vadd.f32 0.0, %v766
        %v768 = vpop.f32.mrb[0].mxu0
        %v769 = vadd.f32 0.0, %v768
        %v770 = vpop.f32.mrb[0].mxu0
        %v771 = vadd.f32 0.0, %v770
        %772 = vmatprep.mubr.bf16.mxu0 %v325
        %773 = vmatmul.mubr.bf16.gmra.mrb[0].mxu0 %v324
        %v774 = vpop.f32.mrb[0].mxu0
        %v775 = vadd.f32 0.0, %v774
        %v776 = vpop.f32.mrb[0].mxu0
        %v777 = vadd.f32 0.0, %v776
        %v778 = vpop.f32.mrb[0].mxu0
        %v779 = vadd.f32 0.0, %v778
        %v780 = vpop.f32.mrb[0].mxu0
        %v781 = vadd.f32 0.0, %v780
        %782 = vdwg.mxu0
        %783 = vmatprep.subr.bf16.mxu0 %v615
        %784 = vmatpush1.bf16.xpose.msra.mxu0 %v614
        %785 = vmatprep.subr.bf16.mxu0 %v617
        %786 = vmatpush1.bf16.xpose.msra.mxu0 %v616
        %787 = vmatprep.subr.bf16.mxu0 %v619
        %788 = vmatpush1.bf16.xpose.msra.mxu0 %v618
        %789 = vmatprep.subr.bf16.mxu0 %v621
        %790 = vmatpush1.bf16.xpose.msra.mxu0 %v620
        %791 = vmatprep.subr.bf16.mxu0 %v623
        %792 = vmatpush1.bf16.xpose.msra.mxu0 %v622
        %793 = vmatprep.subr.bf16.mxu0 %v625
        %794 = vmatpush1.bf16.xpose.msra.mxu0 %v624
        %795 = vmatprep.subr.bf16.mxu0 %v627
        %796 = vmatpush1.bf16.xpose.msra.mxu0 %v626
        %797 = vmatprep.subr.bf16.mxu0 %v629
        %798 = vmatpush1.bf16.xpose.msra.mxu0 %v628
        %799 = vmatprep.subr.bf16.mxu0 %v631
        %800 = vmatpush1.bf16.xpose.msra.mxu0 %v630
        %801 = vmatprep.subr.bf16.mxu0 %v633
        %802 = vmatpush1.bf16.xpose.msra.mxu0 %v632
        %803 = vmatprep.subr.bf16.mxu0 %v635
        %804 = vmatpush1.bf16.xpose.msra.mxu0 %v634
        %805 = vmatprep.subr.bf16.mxu0 %v637
        %806 = vmatpush1.bf16.xpose.msra.mxu0 %v636
        %807 = vmatprep.subr.bf16.mxu0 %v639
        %808 = vmatpush1.bf16.xpose.msra.mxu0 %v638
        %809 = vmatprep.subr.bf16.mxu0 %v641
        %810 = vmatpush1.bf16.xpose.msra.mxu0 %v640
        %811 = vmatprep.subr.bf16.mxu0 %v643
        %812 = vmatpush1.bf16.xpose.msra.mxu0 %v642
        %813 = vmatprep.subr.bf16.mxu0 %v645
        %814 = vmatpush1.bf16.xpose.msra.mxu0 %v644
        %815 = vmatprep.mubr.bf16.mxu0 %v319
        %816 = vmatmul.mubr.bf16.gmra.mrb[0].mxu0 %v318
        %v817 = vpop.f32.mrb[0].mxu0
        %v818 = vadd.f32 0.0, %v817
        %v819 = vpop.f32.mrb[0].mxu0
        %v820 = vadd.f32 0.0, %v819
        %v821 = vpop.f32.mrb[0].mxu0
        %v822 = vadd.f32 0.0, %v821
        %v823 = vpop.f32.mrb[0].mxu0
        %v824 = vadd.f32 0.0, %v823
        %825 = vmatprep.mubr.bf16.mxu0 %v321
        %826 = vmatmul.mubr.bf16.gmra.mrb[0].mxu0 %v320
        %v827 = vpop.f32.mrb[0].mxu0
        %v828 = vadd.f32 0.0, %v827
        %v829 = vpop.f32.mrb[0].mxu0
        %v830 = vadd.f32 0.0, %v829
        %v831 = vpop.f32.mrb[0].mxu0
        %v832 = vadd.f32 0.0, %v831
        %v833 = vpop.f32.mrb[0].mxu0
        %v834 = vadd.f32 0.0, %v833
        %835 = vmatprep.mubr.bf16.mxu0 %v323
        %836 = vmatmul.mubr.bf16.gmra.mrb[0].mxu0 %v322
        %v837 = vpop.f32.mrb[0].mxu0
        %v838 = vadd.f32 0.0, %v837
        %v839 = vpop.f32.mrb[0].mxu0
        %v840 = vadd.f32 0.0, %v839
        %v841 = vpop.f32.mrb[0].mxu0
        %v842 = vadd.f32 0.0, %v841
        %v843 = vpop.f32.mrb[0].mxu0
        %v844 = vadd.f32 0.0, %v843
        %845 = vmatprep.mubr.bf16.mxu0 %v325
        %846 = vmatmul.mubr.bf16.gmra.mrb[0].mxu0 %v324
        %v847 = vpop.f32.mrb[0].mxu0
        %v848 = vadd.f32 0.0, %v847
        %v849 = vpop.f32.mrb[0].mxu0
        %v850 = vadd.f32 0.0, %v849
        %v851 = vpop.f32.mrb[0].mxu0
        %v852 = vadd.f32 0.0, %v851
        %v853 = vpop.f32.mrb[0].mxu0
        %v854 = vadd.f32 0.0, %v853
        %855 = vdwg.mxu0
        %v856 = vld [vmem:[%s2] sm:$0xf]
        %v858 = vlaneseq
        %v859 = vshrl.u32 %v858, 7
        %v860 = vsub.s32 0, %v859
        %v861 = vrot.slane %v856, %v860
        %v862 = vlaneseq
        %v863 = vshrl.u32 %v862, 7
        %v864 = vsub.s32 1, %v863
        %v865 = vrot.slane %v856, %v864
        %v866 = vlaneseq
        %v867 = vshrl.u32 %v866, 7
        %v868 = vsub.s32 2, %v867
        %v869 = vrot.slane %v856, %v868
        %v870 = vlaneseq
        %v871 = vshrl.u32 %v870, 7
        %v872 = vsub.s32 3, %v871
        %v873 = vrot.slane %v856, %v872
        %v878 = vmul.f32 %v745, %v861
        %v879 = vmul.f32 %v747, %v865
        %v880 = vmul.f32 %v818, %v869
        %v881 = vmul.f32 %v820, %v873
        %v882 = vmul.f32 %v749, %v861
        %v883 = vmul.f32 %v751, %v865
        %v884 = vmul.f32 %v822, %v869
        %v885 = vmul.f32 %v824, %v873
        %v886 = vmul.f32 %v755, %v861
        %v887 = vmul.f32 %v757, %v865
        %v888 = vmul.f32 %v828, %v869
        %v889 = vmul.f32 %v830, %v873
        %v890 = vmul.f32 %v759, %v861
        %v891 = vmul.f32 %v761, %v865
        %v892 = vmul.f32 %v832, %v869
        %v893 = vmul.f32 %v834, %v873
        %v894 = vmul.f32 %v765, %v861
        %v895 = vmul.f32 %v767, %v865
        %v896 = vmul.f32 %v838, %v869
        %v897 = vmul.f32 %v840, %v873
        %v898 = vmul.f32 %v769, %v861
        %v899 = vmul.f32 %v771, %v865
        %v900 = vmul.f32 %v842, %v869
        %v901 = vmul.f32 %v844, %v873
        %v902 = vmul.f32 %v775, %v861
        %v903 = vmul.f32 %v777, %v865
        %v904 = vmul.f32 %v848, %v869
        %v905 = vmul.f32 %v850, %v873
        %v906 = vmul.f32 %v779, %v861
        %v907 = vmul.f32 %v781, %v865
        %v908 = vmul.f32 %v852, %v869
        %v909 = vmul.f32 %v854, %v873
        %v910 = vld [vmem:[%s3] sm:$0xf]
        %v912 = vlaneseq
        %v913 = vshrl.u32 %v912, 7
        %v914 = vsub.s32 0, %v913
        %v915 = vrot.slane %v910, %v914
        %v916 = vlaneseq
        %v917 = vshrl.u32 %v916, 7
        %v918 = vsub.s32 1, %v917
        %v919 = vrot.slane %v910, %v918
        %v920 = vlaneseq
        %v921 = vshrl.u32 %v920, 7
        %v922 = vsub.s32 2, %v921
        %v923 = vrot.slane %v910, %v922
        %v924 = vlaneseq
        %v925 = vshrl.u32 %v924, 7
        %v926 = vsub.s32 3, %v925
        %v927 = vrot.slane %v910, %v926
        %v932 = vadd.f32 %v878, %v915
        %v933 = vadd.f32 %v879, %v919
        %v934 = vadd.f32 %v880, %v923
        %v935 = vadd.f32 %v881, %v927
        %v936 = vadd.f32 %v882, %v915
        %v937 = vadd.f32 %v883, %v919
        %v938 = vadd.f32 %v884, %v923
        %v939 = vadd.f32 %v885, %v927
        %v940 = vadd.f32 %v886, %v915
        %v941 = vadd.f32 %v887, %v919
        %v942 = vadd.f32 %v888, %v923
        %v943 = vadd.f32 %v889, %v927
        %v944 = vadd.f32 %v890, %v915
        %v945 = vadd.f32 %v891, %v919
        %v946 = vadd.f32 %v892, %v923
        %v947 = vadd.f32 %v893, %v927
        %v948 = vadd.f32 %v894, %v915
        %v949 = vadd.f32 %v895, %v919
        %v950 = vadd.f32 %v896, %v923
        %v951 = vadd.f32 %v897, %v927
        %v952 = vadd.f32 %v898, %v915
        %v953 = vadd.f32 %v899, %v919
        %v954 = vadd.f32 %v900, %v923
        %v955 = vadd.f32 %v901, %v927
        %v956 = vadd.f32 %v902, %v915
        %v957 = vadd.f32 %v903, %v919
        %v958 = vadd.f32 %v904, %v923
        %v959 = vadd.f32 %v905, %v927
        %v960 = vadd.f32 %v906, %v915
        %v961 = vadd.f32 %v907, %v919
        %v962 = vadd.f32 %v908, %v923
        %v963 = vadd.f32 %v909, %v927
        %v964 = vmax.f32 %v932, 0.0
        %v965 = vmax.f32 %v933, 0.0
        %v966 = vmax.f32 %v934, 0.0
        %v967 = vmax.f32 %v935, 0.0
        %v968 = vmax.f32 %v936, 0.0
        %v969 = vmax.f32 %v937, 0.0
        %v970 = vmax.f32 %v938, 0.0
        %v971 = vmax.f32 %v939, 0.0
        %v972 = vmax.f32 %v940, 0.0
        %v973 = vmax.f32 %v941, 0.0
        %v974 = vmax.f32 %v942, 0.0
        %v975 = vmax.f32 %v943, 0.0
        %v976 = vmax.f32 %v944, 0.0
        %v977 = vmax.f32 %v945, 0.0
        %v978 = vmax.f32 %v946, 0.0
        %v979 = vmax.f32 %v947, 0.0
        %v980 = vmax.f32 %v948, 0.0
        %v981 = vmax.f32 %v949, 0.0
        %v982 = vmax.f32 %v950, 0.0
        %v983 = vmax.f32 %v951, 0.0
        %v984 = vmax.f32 %v952, 0.0
        %v985 = vmax.f32 %v953, 0.0
        %v986 = vmax.f32 %v954, 0.0
        %v987 = vmax.f32 %v955, 0.0
        %v988 = vmax.f32 %v956, 0.0
        %v989 = vmax.f32 %v957, 0.0
        %v990 = vmax.f32 %v958, 0.0
        %v991 = vmax.f32 %v959, 0.0
        %v992 = vmax.f32 %v960, 0.0
        %v993 = vmax.f32 %v961, 0.0
        %v994 = vmax.f32 %v962, 0.0
        %v995 = vmax.f32 %v963, 0.0
        %v996 = vpack.c.bf16 %v968, %v964
        %v997 = vpack.c.bf16 %v969, %v965
        %v998 = vpack.c.bf16 %v970, %v966
        %v999 = vpack.c.bf16 %v971, %v967
        %v1000 = vpack.c.bf16 %v976, %v972
        %v1001 = vpack.c.bf16 %v977, %v973
        %v1002 = vpack.c.bf16 %v978, %v974
        %v1003 = vpack.c.bf16 %v979, %v975
        %v1004 = vpack.c.bf16 %v984, %v980
        %v1005 = vpack.c.bf16 %v985, %v981
        %v1006 = vpack.c.bf16 %v986, %v982
        %v1007 = vpack.c.bf16 %v987, %v983
        %v1008 = vpack.c.bf16 %v992, %v988
        %v1009 = vpack.c.bf16 %v993, %v989
        %v1010 = vpack.c.bf16 %v994, %v990
        %v1011 = vpack.c.bf16 %v995, %v991
        %v1012 = vld [vmem:[#allocation7] sm:$0xff]
        %v1013 = vld [vmem:[#allocation7 + $0x8] sm:$0xff]
        %v1014 = vld [vmem:[#allocation7 + $0x10] sm:$0xff]
        %v1015 = vld [vmem:[#allocation7 + $0x18] sm:$0xff]
        %v1016 = vld [vmem:[#allocation7 + $0x20] sm:$0xff]
        %v1017 = vld [vmem:[#allocation7 + $0x28] sm:$0xff]
        %v1018 = vld [vmem:[#allocation7 + $0x30] sm:$0xff]
        %v1019 = vld [vmem:[#allocation7 + $0x38] sm:$0xff]
        %v1020 = vld [vmem:[#allocation7 + $0x40] sm:$0xff]
        %v1021 = vld [vmem:[#allocation7 + $0x48] sm:$0xff]
        %v1022 = vld [vmem:[#allocation7 + $0x50] sm:$0xff]
        %v1023 = vld [vmem:[#allocation7 + $0x58] sm:$0xff]
        %v1024 = vld [vmem:[#allocation7 + $0x60] sm:$0xff]
        %v1025 = vld [vmem:[#allocation7 + $0x68] sm:$0xff]
        %v1026 = vld [vmem:[#allocation7 + $0x70] sm:$0xff]
        %v1027 = vld [vmem:[#allocation7 + $0x78] sm:$0xff]
        %v1028 = vld [vmem:[#allocation7 + $0x80] sm:$0xff]
        %v1029 = vld [vmem:[#allocation7 + $0x88] sm:$0xff]
        %v1030 = vld [vmem:[#allocation7 + $0x90] sm:$0xff]
        %v1031 = vld [vmem:[#allocation7 + $0x98] sm:$0xff]
        %v1032 = vld [vmem:[#allocation7 + $0xa0] sm:$0xff]
        %v1033 = vld [vmem:[#allocation7 + $0xa8] sm:$0xff]
        %v1034 = vld [vmem:[#allocation7 + $0xb0] sm:$0xff]
        %v1035 = vld [vmem:[#allocation7 + $0xb8] sm:$0xff]
        %v1036 = vld [vmem:[#allocation7 + $0xc0] sm:$0xff]
        %v1037 = vld [vmem:[#allocation7 + $0xc8] sm:$0xff]
        %v1038 = vld [vmem:[#allocation7 + $0xd0] sm:$0xff]
        %v1039 = vld [vmem:[#allocation7 + $0xd8] sm:$0xff]
        %v1040 = vld [vmem:[#allocation7 + $0xe0] sm:$0xff]
        %v1041 = vld [vmem:[#allocation7 + $0xe8] sm:$0xff]
        %v1042 = vld [vmem:[#allocation7 + $0xf0] sm:$0xff]
        %v1043 = vld [vmem:[#allocation7 + $0xf8] sm:$0xff]
        %v1044 = vld [vmem:[#allocation7 + $0x100] sm:$0xff]
        %v1045 = vld [vmem:[#allocation7 + $0x108] sm:$0xff]
        %v1046 = vld [vmem:[#allocation7 + $0x110] sm:$0xff]
        %v1047 = vld [vmem:[#allocation7 + $0x118] sm:$0xff]
        %v1048 = vld [vmem:[#allocation7 + $0x120] sm:$0xff]
        %v1049 = vld [vmem:[#allocation7 + $0x128] sm:$0xff]
        %v1050 = vld [vmem:[#allocation7 + $0x130] sm:$0xff]
        %v1051 = vld [vmem:[#allocation7 + $0x138] sm:$0xff]
        %v1052 = vld [vmem:[#allocation7 + $0x140] sm:$0xff]
        %v1053 = vld [vmem:[#allocation7 + $0x148] sm:$0xff]
        %v1054 = vld [vmem:[#allocation7 + $0x150] sm:$0xff]
        %v1055 = vld [vmem:[#allocation7 + $0x158] sm:$0xff]
        %v1056 = vld [vmem:[#allocation7 + $0x160] sm:$0xff]
        %v1057 = vld [vmem:[#allocation7 + $0x168] sm:$0xff]
        %v1058 = vld [vmem:[#allocation7 + $0x170] sm:$0xff]
        %v1059 = vld [vmem:[#allocation7 + $0x178] sm:$0xff]
        %v1060 = vld [vmem:[#allocation7 + $0x180] sm:$0xff]
        %v1061 = vld [vmem:[#allocation7 + $0x188] sm:$0xff]
        %v1062 = vld [vmem:[#allocation7 + $0x190] sm:$0xff]
        %v1063 = vld [vmem:[#allocation7 + $0x198] sm:$0xff]
        %v1064 = vld [vmem:[#allocation7 + $0x1a0] sm:$0xff]
        %v1065 = vld [vmem:[#allocation7 + $0x1a8] sm:$0xff]
        %v1066 = vld [vmem:[#allocation7 + $0x1b0] sm:$0xff]
        %v1067 = vld [vmem:[#allocation7 + $0x1b8] sm:$0xff]
        %v1068 = vld [vmem:[#allocation7 + $0x1c0] sm:$0xff]
        %v1069 = vld [vmem:[#allocation7 + $0x1c8] sm:$0xff]
        %v1070 = vld [vmem:[#allocation7 + $0x1d0] sm:$0xff]
        %v1071 = vld [vmem:[#allocation7 + $0x1d8] sm:$0xff]
        %v1072 = vld [vmem:[#allocation7 + $0x1e0] sm:$0xff]
        %v1073 = vld [vmem:[#allocation7 + $0x1e8] sm:$0xff]
        %v1074 = vld [vmem:[#allocation7 + $0x1f0] sm:$0xff]
        %v1075 = vld [vmem:[#allocation7 + $0x1f8] sm:$0xff]
        %v1076 = vld [vmem:[%s5] sm:$0x3]
        %v1078 = vlaneseq
        %v1079 = vshrl.u32 %v1078, 7
        %v1080 = vsub.s32 0, %v1079
        %v1081 = vrot.slane %v1076, %v1080
        %v1082 = vlaneseq
        %v1083 = vshrl.u32 %v1082, 7
        %v1084 = vsub.s32 1, %v1083
        %v1085 = vrot.slane %v1076, %v1084
        %v1152 = vunpack.c.l.b16 %v1012
        %v1153 = vunpack.c.h.b16 %v1012
        %v1154 = vunpack.c.l.b16 %v1013
        %v1155 = vunpack.c.h.b16 %v1013
        %v1156 = vunpack.c.l.b16 %v1014
        %v1157 = vunpack.c.h.b16 %v1014
        %v1158 = vunpack.c.l.b16 %v1015
        %v1159 = vunpack.c.h.b16 %v1015
        %v1160 = vunpack.c.l.b16 %v1016
        %v1161 = vunpack.c.h.b16 %v1016
        %v1162 = vunpack.c.l.b16 %v1017
        %v1163 = vunpack.c.h.b16 %v1017
        %v1164 = vunpack.c.l.b16 %v1018
        %v1165 = vunpack.c.h.b16 %v1018
        %v1166 = vunpack.c.l.b16 %v1019
        %v1167 = vunpack.c.h.b16 %v1019
        %v1168 = vunpack.c.l.b16 %v1020
        %v1169 = vunpack.c.h.b16 %v1020
        %v1170 = vunpack.c.l.b16 %v1021
        %v1171 = vunpack.c.h.b16 %v1021
        %v1172 = vunpack.c.l.b16 %v1022
        %v1173 = vunpack.c.h.b16 %v1022
        %v1174 = vunpack.c.l.b16 %v1023
        %v1175 = vunpack.c.h.b16 %v1023
        %v1176 = vunpack.c.l.b16 %v1024
        %v1177 = vunpack.c.h.b16 %v1024
        %v1178 = vunpack.c.l.b16 %v1025
        %v1179 = vunpack.c.h.b16 %v1025
        %v1180 = vunpack.c.l.b16 %v1026
        %v1181 = vunpack.c.h.b16 %v1026
        %v1182 = vunpack.c.l.b16 %v1027
        %v1183 = vunpack.c.h.b16 %v1027
        %v1184 = vunpack.c.l.b16 %v1028
        %v1185 = vunpack.c.h.b16 %v1028
        %v1186 = vunpack.c.l.b16 %v1029
        %v1187 = vunpack.c.h.b16 %v1029
        %v1188 = vunpack.c.l.b16 %v1030
        %v1189 = vunpack.c.h.b16 %v1030
        %v1190 = vunpack.c.l.b16 %v1031
        %v1191 = vunpack.c.h.b16 %v1031
        %v1192 = vunpack.c.l.b16 %v1032
        %v1193 = vunpack.c.h.b16 %v1032
        %v1194 = vunpack.c.l.b16 %v1033
        %v1195 = vunpack.c.h.b16 %v1033
        %v1196 = vunpack.c.l.b16 %v1034
        %v1197 = vunpack.c.h.b16 %v1034
        %v1198 = vunpack.c.l.b16 %v1035
        %v1199 = vunpack.c.h.b16 %v1035
        %v1200 = vunpack.c.l.b16 %v1036
        %v1201 = vunpack.c.h.b16 %v1036
        %v1202 = vunpack.c.l.b16 %v1037
        %v1203 = vunpack.c.h.b16 %v1037
        %v1204 = vunpack.c.l.b16 %v1038
        %v1205 = vunpack.c.h.b16 %v1038
        %v1206 = vunpack.c.l.b16 %v1039
        %v1207 = vunpack.c.h.b16 %v1039
        %v1208 = vunpack.c.l.b16 %v1040
        %v1209 = vunpack.c.h.b16 %v1040
        %v1210 = vunpack.c.l.b16 %v1041
        %v1211 = vunpack.c.h.b16 %v1041
        %v1212 = vunpack.c.l.b16 %v1042
        %v1213 = vunpack.c.h.b16 %v1042
        %v1214 = vunpack.c.l.b16 %v1043
        %v1215 = vunpack.c.h.b16 %v1043
        %v1216 = vunpack.c.l.b16 %v1044
        %v1217 = vunpack.c.h.b16 %v1044
        %v1218 = vunpack.c.l.b16 %v1045
        %v1219 = vunpack.c.h.b16 %v1045
        %v1220 = vunpack.c.l.b16 %v1046
        %v1221 = vunpack.c.h.b16 %v1046
        %v1222 = vunpack.c.l.b16 %v1047
        %v1223 = vunpack.c.h.b16 %v1047
        %v1224 = vunpack.c.l.b16 %v1048
        %v1225 = vunpack.c.h.b16 %v1048
        %v1226 = vunpack.c.l.b16 %v1049
        %v1227 = vunpack.c.h.b16 %v1049
        %v1228 = vunpack.c.l.b16 %v1050
        %v1229 = vunpack.c.h.b16 %v1050
        %v1230 = vunpack.c.l.b16 %v1051
        %v1231 = vunpack.c.h.b16 %v1051
        %v1232 = vunpack.c.l.b16 %v1052
        %v1233 = vunpack.c.h.b16 %v1052
        %v1234 = vunpack.c.l.b16 %v1053
        %v1235 = vunpack.c.h.b16 %v1053
        %v1236 = vunpack.c.l.b16 %v1054
        %v1237 = vunpack.c.h.b16 %v1054
        %v1238 = vunpack.c.l.b16 %v1055
        %v1239 = vunpack.c.h.b16 %v1055
        %v1240 = vunpack.c.l.b16 %v1056
        %v1241 = vunpack.c.h.b16 %v1056
        %v1242 = vunpack.c.l.b16 %v1057
        %v1243 = vunpack.c.h.b16 %v1057
        %v1244 = vunpack.c.l.b16 %v1058
        %v1245 = vunpack.c.h.b16 %v1058
        %v1246 = vunpack.c.l.b16 %v1059
        %v1247 = vunpack.c.h.b16 %v1059
        %v1248 = vunpack.c.l.b16 %v1060
        %v1249 = vunpack.c.h.b16 %v1060
        %v1250 = vunpack.c.l.b16 %v1061
        %v1251 = vunpack.c.h.b16 %v1061
        %v1252 = vunpack.c.l.b16 %v1062
        %v1253 = vunpack.c.h.b16 %v1062
        %v1254 = vunpack.c.l.b16 %v1063
        %v1255 = vunpack.c.h.b16 %v1063
        %v1256 = vunpack.c.l.b16 %v1064
        %v1257 = vunpack.c.h.b16 %v1064
        %v1258 = vunpack.c.l.b16 %v1065
        %v1259 = vunpack.c.h.b16 %v1065
        %v1260 = vunpack.c.l.b16 %v1066
        %v1261 = vunpack.c.h.b16 %v1066
        %v1262 = vunpack.c.l.b16 %v1067
        %v1263 = vunpack.c.h.b16 %v1067
        %v1264 = vunpack.c.l.b16 %v1068
        %v1265 = vunpack.c.h.b16 %v1068
        %v1266 = vunpack.c.l.b16 %v1069
        %v1267 = vunpack.c.h.b16 %v1069
        %v1268 = vunpack.c.l.b16 %v1070
        %v1269 = vunpack.c.h.b16 %v1070
        %v1270 = vunpack.c.l.b16 %v1071
        %v1271 = vunpack.c.h.b16 %v1071
        %v1272 = vunpack.c.l.b16 %v1072
        %v1273 = vunpack.c.h.b16 %v1072
        %v1274 = vunpack.c.l.b16 %v1073
        %v1275 = vunpack.c.h.b16 %v1073
        %v1276 = vunpack.c.l.b16 %v1074
        %v1277 = vunpack.c.h.b16 %v1074
        %v1278 = vunpack.c.l.b16 %v1075
        %v1279 = vunpack.c.h.b16 %v1075
        %v1280 = vpack.c.b16 %v1156, %v1152
        %v1281 = vpack.c.b16 %v1157, %v1153
        %v1282 = vpack.c.b16 %v1158, %v1154
        %v1283 = vpack.c.b16 %v1159, %v1155
        %v1284 = vpack.c.b16 %v1164, %v1160
        %v1285 = vpack.c.b16 %v1165, %v1161
        %v1286 = vpack.c.b16 %v1166, %v1162
        %v1287 = vpack.c.b16 %v1167, %v1163
        %v1288 = vpack.c.b16 %v1172, %v1168
        %v1289 = vpack.c.b16 %v1173, %v1169
        %v1290 = vpack.c.b16 %v1174, %v1170
        %v1291 = vpack.c.b16 %v1175, %v1171
        %v1292 = vpack.c.b16 %v1180, %v1176
        %v1293 = vpack.c.b16 %v1181, %v1177
        %v1294 = vpack.c.b16 %v1182, %v1178
        %v1295 = vpack.c.b16 %v1183, %v1179
        %v1296 = vpack.c.b16 %v1188, %v1184
        %v1297 = vpack.c.b16 %v1189, %v1185
        %v1298 = vpack.c.b16 %v1190, %v1186
        %v1299 = vpack.c.b16 %v1191, %v1187
        %v1300 = vpack.c.b16 %v1196, %v1192
        %v1301 = vpack.c.b16 %v1197, %v1193
        %v1302 = vpack.c.b16 %v1198, %v1194
        %v1303 = vpack.c.b16 %v1199, %v1195
        %v1304 = vpack.c.b16 %v1204, %v1200
        %v1305 = vpack.c.b16 %v1205, %v1201
        %v1306 = vpack.c.b16 %v1206, %v1202
        %v1307 = vpack.c.b16 %v1207, %v1203
        %v1308 = vpack.c.b16 %v1212, %v1208
        %v1309 = vpack.c.b16 %v1213, %v1209
        %v1310 = vpack.c.b16 %v1214, %v1210
        %v1311 = vpack.c.b16 %v1215, %v1211
        %v1312 = vpack.c.b16 %v1220, %v1216
        %v1313 = vpack.c.b16 %v1221, %v1217
        %v1314 = vpack.c.b16 %v1222, %v1218
        %v1315 = vpack.c.b16 %v1223, %v1219
        %v1316 = vpack.c.b16 %v1228, %v1224
        %v1317 = vpack.c.b16 %v1229, %v1225
        %v1318 = vpack.c.b16 %v1230, %v1226
        %v1319 = vpack.c.b16 %v1231, %v1227
        %v1320 = vpack.c.b16 %v1236, %v1232
        %v1321 = vpack.c.b16 %v1237, %v1233
        %v1322 = vpack.c.b16 %v1238, %v1234
        %v1323 = vpack.c.b16 %v1239, %v1235
        %v1324 = vpack.c.b16 %v1244, %v1240
        %v1325 = vpack.c.b16 %v1245, %v1241
        %v1326 = vpack.c.b16 %v1246, %v1242
        %v1327 = vpack.c.b16 %v1247, %v1243
        %v1328 = vpack.c.b16 %v1252, %v1248
        %v1329 = vpack.c.b16 %v1253, %v1249
        %v1330 = vpack.c.b16 %v1254, %v1250
        %v1331 = vpack.c.b16 %v1255, %v1251
        %v1332 = vpack.c.b16 %v1260, %v1256
        %v1333 = vpack.c.b16 %v1261, %v1257
        %v1334 = vpack.c.b16 %v1262, %v1258
        %v1335 = vpack.c.b16 %v1263, %v1259
        %v1336 = vpack.c.b16 %v1268, %v1264
        %v1337 = vpack.c.b16 %v1269, %v1265
        %v1338 = vpack.c.b16 %v1270, %v1266
        %v1339 = vpack.c.b16 %v1271, %v1267
        %v1340 = vpack.c.b16 %v1276, %v1272
        %v1341 = vpack.c.b16 %v1277, %v1273
        %v1342 = vpack.c.b16 %v1278, %v1274
        %v1343 = vpack.c.b16 %v1279, %v1275
        %1408 = vmatprep.subr.bf16.mxu0 %v1281
        %1409 = vmatpush1.bf16.xpose.msra.mxu0 %v1280
        %1410 = vmatprep.subr.bf16.mxu0 %v1285
        %1411 = vmatpush1.bf16.xpose.msra.mxu0 %v1284
        %1412 = vmatprep.subr.bf16.mxu0 %v1289
        %1413 = vmatpush1.bf16.xpose.msra.mxu0 %v1288
        %1414 = vmatprep.subr.bf16.mxu0 %v1293
        %1415 = vmatpush1.bf16.xpose.msra.mxu0 %v1292
        %1416 = vmatprep.subr.bf16.mxu0 %v1297
        %1417 = vmatpush1.bf16.xpose.msra.mxu0 %v1296
        %1418 = vmatprep.subr.bf16.mxu0 %v1301
        %1419 = vmatpush1.bf16.xpose.msra.mxu0 %v1300
        %1420 = vmatprep.subr.bf16.mxu0 %v1305
        %1421 = vmatpush1.bf16.xpose.msra.mxu0 %v1304
        %1422 = vmatprep.subr.bf16.mxu0 %v1309
        %1423 = vmatpush1.bf16.xpose.msra.mxu0 %v1308
        %1424 = vmatprep.subr.bf16.mxu0 %v1313
        %1425 = vmatpush1.bf16.xpose.msra.mxu0 %v1312
        %1426 = vmatprep.subr.bf16.mxu0 %v1317
        %1427 = vmatpush1.bf16.xpose.msra.mxu0 %v1316
        %1428 = vmatprep.subr.bf16.mxu0 %v1321
        %1429 = vmatpush1.bf16.xpose.msra.mxu0 %v1320
        %1430 = vmatprep.subr.bf16.mxu0 %v1325
        %1431 = vmatpush1.bf16.xpose.msra.mxu0 %v1324
        %1432 = vmatprep.subr.bf16.mxu0 %v1329
        %1433 = vmatpush1.bf16.xpose.msra.mxu0 %v1328
        %1434 = vmatprep.subr.bf16.mxu0 %v1333
        %1435 = vmatpush1.bf16.xpose.msra.mxu0 %v1332
        %1436 = vmatprep.subr.bf16.mxu0 %v1337
        %1437 = vmatpush1.bf16.xpose.msra.mxu0 %v1336
        %1438 = vmatprep.subr.bf16.mxu0 %v1341
        %1439 = vmatpush1.bf16.xpose.msra.mxu0 %v1340
        %1440 = vmatprep.mubr.bf16.mxu0 %v997
        %1441 = vmatmul.mubr.bf16.gmra.mrb[0].mxu0 %v996
        %v1442 = vpop.f32.mrb[0].mxu0
        %v1443 = vadd.f32 %v1081, %v1442
        %v1444 = vpop.f32.mrb[0].mxu0
        %v1445 = vadd.f32 %v1085, %v1444
        %v1446 = vpop.f32.mrb[0].mxu0
        %v1447 = vadd.f32 %v1081, %v1446
        %v1448 = vpop.f32.mrb[0].mxu0
        %v1449 = vadd.f32 %v1085, %v1448
        %1450 = vmatprep.mubr.bf16.mxu0 %v1001
        %1451 = vmatmul.mubr.bf16.gmra.mrb[0].mxu0 %v1000
        %v1452 = vpop.f32.mrb[0].mxu0
        %v1453 = vadd.f32 %v1081, %v1452
        %v1454 = vpop.f32.mrb[0].mxu0
        %v1455 = vadd.f32 %v1085, %v1454
        %v1456 = vpop.f32.mrb[0].mxu0
        %v1457 = vadd.f32 %v1081, %v1456
        %v1458 = vpop.f32.mrb[0].mxu0
        %v1459 = vadd.f32 %v1085, %v1458
        %1460 = vmatprep.mubr.bf16.mxu0 %v1005
        %1461 = vmatmul.mubr.bf16.gmra.mrb[0].mxu0 %v1004
        %v1462 = vpop.f32.mrb[0].mxu0
        %v1463 = vadd.f32 %v1081, %v1462
        %v1464 = vpop.f32.mrb[0].mxu0
        %v1465 = vadd.f32 %v1085, %v1464
        %v1466 = vpop.f32.mrb[0].mxu0
        %v1467 = vadd.f32 %v1081, %v1466
        %v1468 = vpop.f32.mrb[0].mxu0
        %v1469 = vadd.f32 %v1085, %v1468
        %1470 = vmatprep.mubr.bf16.mxu0 %v1009
        %1471 = vmatmul.mubr.bf16.gmra.mrb[0].mxu0 %v1008
        %v1472 = vpop.f32.mrb[0].mxu0
        %v1473 = vadd.f32 %v1081, %v1472
        %v1474 = vpop.f32.mrb[0].mxu0
        %v1475 = vadd.f32 %v1085, %v1474
        %v1476 = vpop.f32.mrb[0].mxu0
        %v1477 = vadd.f32 %v1081, %v1476
        %v1478 = vpop.f32.mrb[0].mxu0
        %v1479 = vadd.f32 %v1085, %v1478
        %1480 = vdwg.mxu0
        %1481 = vmatprep.subr.bf16.mxu0 %v1283
        %1482 = vmatpush1.bf16.xpose.msra.mxu0 %v1282
        %1483 = vmatprep.subr.bf16.mxu0 %v1287
        %1484 = vmatpush1.bf16.xpose.msra.mxu0 %v1286
        %1485 = vmatprep.subr.bf16.mxu0 %v1291
        %1486 = vmatpush1.bf16.xpose.msra.mxu0 %v1290
        %1487 = vmatprep.subr.bf16.mxu0 %v1295
        %1488 = vmatpush1.bf16.xpose.msra.mxu0 %v1294
        %1489 = vmatprep.subr.bf16.mxu0 %v1299
        %1490 = vmatpush1.bf16.xpose.msra.mxu0 %v1298
        %1491 = vmatprep.subr.bf16.mxu0 %v1303
        %1492 = vmatpush1.bf16.xpose.msra.mxu0 %v1302
        %1493 = vmatprep.subr.bf16.mxu0 %v1307
        %1494 = vmatpush1.bf16.xpose.msra.mxu0 %v1306
        %1495 = vmatprep.subr.bf16.mxu0 %v1311
        %1496 = vmatpush1.bf16.xpose.msra.mxu0 %v1310
        %1497 = vmatprep.subr.bf16.mxu0 %v1315
        %1498 = vmatpush1.bf16.xpose.msra.mxu0 %v1314
        %1499 = vmatprep.subr.bf16.mxu0 %v1319
        %1500 = vmatpush1.bf16.xpose.msra.mxu0 %v1318
        %1501 = vmatprep.subr.bf16.mxu0 %v1323
        %1502 = vmatpush1.bf16.xpose.msra.mxu0 %v1322
        %1503 = vmatprep.subr.bf16.mxu0 %v1327
        %1504 = vmatpush1.bf16.xpose.msra.mxu0 %v1326
        %1505 = vmatprep.subr.bf16.mxu0 %v1331
        %1506 = vmatpush1.bf16.xpose.msra.mxu0 %v1330
        %1507 = vmatprep.subr.bf16.mxu0 %v1335
        %1508 = vmatpush1.bf16.xpose.msra.mxu0 %v1334
        %1509 = vmatprep.subr.bf16.mxu0 %v1339
        %1510 = vmatpush1.bf16.xpose.msra.mxu0 %v1338
        %1511 = vmatprep.subr.bf16.mxu0 %v1343
        %1512 = vmatpush1.bf16.xpose.msra.mxu0 %v1342
        %1513 = vmatprep.mubr.bf16.mxu0 %v999
        %1514 = vmatmul.mubr.bf16.gmra.mrb[0].mxu0 %v998
        %v1515 = vpop.f32.mrb[0].mxu0
        %v1516 = vadd.f32 %v1443, %v1515
        %v1517 = vpop.f32.mrb[0].mxu0
        %v1518 = vadd.f32 %v1445, %v1517
        %v1519 = vpop.f32.mrb[0].mxu0
        %v1520 = vadd.f32 %v1447, %v1519
        %v1521 = vpop.f32.mrb[0].mxu0
        %v1522 = vadd.f32 %v1449, %v1521
        %1523 = vmatprep.mubr.bf16.mxu0 %v1003
        %1524 = vmatmul.mubr.bf16.gmra.mrb[0].mxu0 %v1002
        %v1525 = vpop.f32.mrb[0].mxu0
        %v1526 = vadd.f32 %v1453, %v1525
        %v1527 = vpop.f32.mrb[0].mxu0
        %v1528 = vadd.f32 %v1455, %v1527
        %v1529 = vpop.f32.mrb[0].mxu0
        %v1530 = vadd.f32 %v1457, %v1529
        %v1531 = vpop.f32.mrb[0].mxu0
        %v1532 = vadd.f32 %v1459, %v1531
        %1533 = vmatprep.mubr.bf16.mxu0 %v1007
        %1534 = vmatmul.mubr.bf16.gmra.mrb[0].mxu0 %v1006
        %v1535 = vpop.f32.mrb[0].mxu0
        %v1536 = vadd.f32 %v1463, %v1535
        %v1537 = vpop.f32.mrb[0].mxu0
        %v1538 = vadd.f32 %v1465, %v1537
        %v1539 = vpop.f32.mrb[0].mxu0
        %v1540 = vadd.f32 %v1467, %v1539
        %v1541 = vpop.f32.mrb[0].mxu0
        %v1542 = vadd.f32 %v1469, %v1541
        %1543 = vmatprep.mubr.bf16.mxu0 %v1011
        %1544 = vmatmul.mubr.bf16.gmra.mrb[0].mxu0 %v1010
        %v1545 = vpop.f32.mrb[0].mxu0
        %v1546 = vadd.f32 %v1473, %v1545
        %v1547 = vpop.f32.mrb[0].mxu0
        %v1548 = vadd.f32 %v1475, %v1547
        %v1549 = vpop.f32.mrb[0].mxu0
        %v1550 = vadd.f32 %v1477, %v1549
        %v1551 = vpop.f32.mrb[0].mxu0
        %v1552 = vadd.f32 %v1479, %v1551
        %1553 = vdwg.mxu0
        %1554 = vst [vmem:[%s299] sm:$0xff] %v1516
        %1555 = vst [vmem:[%s299 + $0x8] sm:$0xff] %v1518
        %1556 = vst [vmem:[%s299 + $0x10] sm:$0xff] %v1520
        %1557 = vst [vmem:[%s299 + $0x18] sm:$0xff] %v1522
        %1558 = vst [vmem:[%s299 + $0x20] sm:$0xff] %v1526
        %1559 = vst [vmem:[%s299 + $0x28] sm:$0xff] %v1528
        %1560 = vst [vmem:[%s299 + $0x30] sm:$0xff] %v1530
        %1561 = vst [vmem:[%s299 + $0x38] sm:$0xff] %v1532
        %1562 = vst [vmem:[%s299 + $0x40] sm:$0xff] %v1536
        %1563 = vst [vmem:[%s299 + $0x48] sm:$0xff] %v1538
        %1564 = vst [vmem:[%s299 + $0x50] sm:$0xff] %v1540
        %1565 = vst [vmem:[%s299 + $0x58] sm:$0xff] %v1542
        %1566 = vst [vmem:[%s299 + $0x60] sm:$0xff] %v1546
        %1567 = vst [vmem:[%s299 + $0x68] sm:$0xff] %v1548
        %1568 = vst [vmem:[%s299 + $0x70] sm:$0xff] %v1550
        %1569 = vst [vmem:[%s299 + $0x78] sm:$0xff] %v1552
        %s1570 = sand.u32 %s163, 1
        %s1571 = scalar_lea.sflag [#allocation4], %s1570
        %s1572 = sand.u32 %s163, 1
        %s1573 = smul.addr %s1572, 128
        %s1574 = scalar_lea.vmem [#allocation8], %s1573
        // Predicated region
        $region57: #{tpu_custom_call.1} parent=43 // pred_check
          %p1575 = pneg %p173
        $region58: #{tpu_custom_call.1} parent=43 // pred_check_branch
          %1577 = sbr.rel (%p1575) target = $region60
        $region59: #{tpu_custom_call.1} parent=43 // pred_region
          %s1578 = smul.u32 8, %s24
          %s1580 = ssub.s32 2048, 2048
          %1581 = vsyncadd %s1571, %s1580
          %s1582 = smul.addr %s1578, 2
          %s1583 = smul.addr %s1582, 128
          %s1584 = scalar_lea.hbm %s6, %s1583
          %s1585 = sshll.u32 %s1574, 4
          %s1586 = int_to_ptr.vmem [resolvable:$true] %s1585
          %1591 = dma.vmem_to_hbm [thread:$0]  %s1586, 2048, %s1584, %s1571, 256, 256, 16
        $region60: #{tpu_custom_call.1} parent=43 // pred_fallthru
          _
      $region44: #{tpu_custom_call.1} parent=5 // pred_fallthru
        _
      %p1592 = scmp.le.s32.totalorder 2, %s19
      // Predicated region
      $region61: #{tpu_custom_call.1} parent=5 // pred_check
        %p1593 = pneg %p1592
      $region62: #{tpu_custom_call.1} parent=5 // pred_check_branch
        %1595 = sbr.rel (%p1593) target = $region64
      $region63: #{tpu_custom_call.1} parent=5 // pred_region
        %s1596 = ssub.s32 %s19, 2
        // Predicated region
        $region65: #{tpu_custom_call.1} parent=63 // pred_check
          %p1597 = pneg %p179
        $region66: #{tpu_custom_call.1} parent=63 // pred_check_branch
          %1599 = sbr.rel (%p1597) target = $region68
        $region67: #{tpu_custom_call.1} parent=63 // pred_region
          %s1600 = sand.u32 %s164, 1
          %s1601 = scalar_lea.sflag [#allocation4], %s1600
          %s1602 = sand.u32 %s164, 1
          %s1603 = smul.addr %s1602, 128
          %s1604 = scalar_lea.vmem [#allocation8], %s1603
          %1605 = dma.done %s1601, 2048
        $region68: #{tpu_custom_call.1} parent=63 // pred_fallthru
          _
      $region64: #{tpu_custom_call.1} parent=5 // pred_fallthru
        _
    $region6: #{tpu_custom_call.1} parent=1 // loop_footer
      %s23 = sadd.s32 1, %s19
    $region7: #{tpu_custom_call.1} parent=1 // loop_footer_branch
      %18 = sbr.rel target = $region3
    $region8: #{tpu_custom_call.1} parent=1 // loop_exit
      _
    %1606 = vsyncpa [#allocation3], 1
    %s1607 = scalar_lea.sflag [#allocation3], 1
    %1608 = vsyncpa %s1607, 1
    %1609 = vsyncpa [#allocation6], 1
    %1610 = vsyncpa [#allocation4], 1
    %s1611 = scalar_lea.sflag [#allocation4], 1
    %1612 = vsyncpa %s1611, 1

</llo_original>
